<compile_context>
chip_gen: v5e
topology: v5e:2x2
jax: 0.10.0
libtpu: 0.0.40
codegen_flags: <defaults>
</compile_context>

<pallas_src>
import numpy as np
import jax
import jax.numpy as jnp
from jax import lax
from jax.experimental import pallas as pl
from jax.experimental.pallas import tpu as pltpu


def _round_up(x, n):
    return ((x + n - 1) // n) * n


def _cdiv(a, b):
    return -(-a // b)


# ----------------------------------------------------------------------------
# Deterministic filter design (pure-numpy re-implementation of scipy.signal
# butter / lfilter_zi -- no scipy, no file I/O).  Host-side, float64.
# ----------------------------------------------------------------------------
def _butter_bandpass(lowcut, highcut, fs, order=4):
    nyq = 0.5 * fs
    wn = np.array([lowcut / nyq, highcut / nyq], dtype=np.float64)
    fs_d = 2.0
    warped = 2.0 * fs_d * np.tan(np.pi * wn / fs_d)
    # analog Butterworth prototype (zpk): no zeros, LHP poles on unit circle
    m = np.arange(-order + 1, order, 2)
    p = -np.exp(1j * np.pi * m / (2 * order))
    k = 1.0
    # lowpass -> bandpass (zpk)
    bw = warped[1] - warped[0]
    wo = np.sqrt(warped[0] * warped[1])
    degree = len(p)
    p_lp = p * bw / 2.0
    p_bp = np.concatenate((p_lp + np.sqrt(p_lp ** 2 - wo ** 2),
                           p_lp - np.sqrt(p_lp ** 2 - wo ** 2)))
    z_bp = np.zeros(degree, dtype=complex)
    k_bp = k * bw ** degree
    # bilinear transform (fs_d = 2)
    fs2 = 2.0 * fs_d
    z_z = (fs2 + z_bp) / (fs2 - z_bp)
    p_z = (fs2 + p_bp) / (fs2 - p_bp)
    z_z = np.append(z_z, -np.ones(len(p_bp) - len(z_bp)))
    k_z = k_bp * np.real(np.prod(fs2 - z_bp) / np.prod(fs2 - p_bp))
    b = np.real(k_z * np.poly(z_z))
    a = np.real(np.poly(p_z))
    return b, a


def _lfilter_zi(b, a):
    b = np.asarray(b, np.float64)
    a = np.asarray(a, np.float64)
    if a[0] != 1.0:
        b = b / a[0]
        a = a / a[0]
    n = max(len(a), len(b))
    a = np.r_[a, np.zeros(n - len(a))]
    b = np.r_[b, np.zeros(n - len(b))]
    comp = np.zeros((n - 1, n - 1))
    comp[0, :] = -a[1:]
    comp[np.arange(1, n - 1), np.arange(0, n - 2)] = 1.0
    i_minus_a = np.eye(n - 1) - comp.T
    rhs = b[1:] - a[1:] * b[0]
    return np.linalg.solve(i_minus_a, rhs)


def _block_ss_matrices(b, a, L):
    """Block state-space form of scipy's DF2T lfilter recursion.

    State update  z[n+1] = A z[n] + Bv x[n],   output y[n] = z[n][0] + D x[n]
    (A = companion(a).T, so lfilter_zi's zi is the fixed point z = A z + Bv).
    For a block of L samples:  Y = Tm @ X + G @ z,   z' = AL @ z + F @ X.
    Tr/Gr/Fr are the reversed-direction variants (process a block last->first),
    used for the zero-phase backward pass.  All computed in float64.
    """
    b = np.asarray(b, np.float64)
    a = np.asarray(a, np.float64)
    b = b / a[0]
    a = a / a[0]
    m = max(len(a), len(b)) - 1
    a = np.r_[a, np.zeros(m + 1 - len(a))]
    b = np.r_[b, np.zeros(m + 1 - len(b))]
    A = np.zeros((m, m))
    A[:, 0] = -a[1:]
    A[np.arange(m - 1), np.arange(1, m)] = 1.0
    Bv = b[1:] - a[1:] * b[0]
    D = b[0]

    pw = [np.eye(m)]
    for _ in range(L):
        pw.append(pw[-1] @ A)

    G = np.stack([pw[k][0, :] for k in range(L)], axis=0)            # (L, m)
    h = np.empty(L)
    h[0] = D
    for k in range(1, L):
        h[k] = pw[k - 1][0, :] @ Bv                                  # impulse resp
    Tm = np.zeros((L, L))
    for k in range(L):
        Tm[k, :k + 1] = h[k::-1]                                     # lower-tri Toeplitz
    AL = pw[L]                                                        # (m, m)
    F = np.stack([pw[L - 1 - i] @ Bv for i in range(L)], axis=1)      # (m, L)

    return dict(Tm=Tm, Tr=Tm[::-1, ::-1].copy(),
                G=G, Gr=G[::-1, :].copy(),
                AL=AL, F=F, Fr=F[:, ::-1].copy())


# ----------------------------------------------------------------------------
# Generation-aware parameters
# ----------------------------------------------------------------------------
def _tpu_generation():
    try:
        kind = jax.devices()[0].device_kind.lower()
    except Exception:
        return None
    for g in (7, 6, 5, 4):
        if "v%d" % g in kind:
            return g
    return None


def _vmem_capacity_bytes(gen):
    try:
        info = pltpu.get_tpu_info()
        cap = getattr(info, "vmem_capacity_bytes", None)
        if cap:
            return int(cap)
    except Exception:
        pass
    return (64 if (gen is not None and gen >= 7) else 128) * (1 << 20)


# ----------------------------------------------------------------------------
# Pallas kernels
# ----------------------------------------------------------------------------
def _make_filtfilt_norm_kernel(*, L, n_blocks, t_ext, t_pad, padlen, keep,
                               out_len, normalize, m):
    """Fused filtfilt (block state-space) + pad/truncate + standardize.

    Batch-major: one (bt, t_pad) tile in, one (bt, out_len) normalized tile out.
    Filtering runs IN PLACE in the input VMEM tile (no full-length scratch).
    """
    pad_tail = t_pad - t_ext
    pad_out = out_len - keep
    inv_denom = 1.0 / float(max(out_len - 1, 1))    # torch unbiased std
    inv_n = 1.0 / float(out_len)
    unrolled = n_blocks <= 8

    def kernel(tmT_ref, trT_ref, gT_ref, grT_ref, alT_ref, fT_ref, frT_ref,
               zi_ref, x_ref, o_ref):
        bt = x_ref.shape[0]
        TmT, TrT = tmT_ref[...], trT_ref[...]          # (L, L)
        GT, GrT = gT_ref[...], grT_ref[...]            # (m, L)
        ALT = alT_ref[...]                             # (m, m)
        FT, FrT = fT_ref[...], frT_ref[...]            # (L, m)
        zi = zi_ref[...]                               # (1, m)

        def mm(a_, b_):
            return jnp.dot(a_, b_, preferred_element_type=jnp.float32)

        def state_mix(z, matT):
            # z: (bt, m) times matT: (m, cols) as m broadcast FMAs on the VPU
            # (keeps the tiny state injection off the MXU critical path).
            acc = z[:, 0:1] * matT[0:1, :]
            for k in range(1, m):
                acc = acc + z[:, k:k + 1] * matT[k:k + 1, :]
            return acc

        def block_step(xb, z, T_, G_, F_):
            yb = mm(xb, T_) + state_mix(z, G_)
            z_new = state_mix(z, ALT) + mm(xb, F_)
            return yb, z_new

        # ---- forward pass: y = lfilter(b, a, ext, zi = zi * ext[0]) --------
        z = zi * x_ref[:, 0:1]                         # (bt, m)

        if unrolled:
            for mb in range(n_blocks):                 # static slices
                base = mb * L
                xb = x_ref[:, base:base + L]
                yb, z = block_step(xb, z, TmT, GT, FT)
                x_ref[:, base:base + L] = yb
        else:
            def fwd(mb, zz):
                base = pl.multiple_of(mb * L, 128)
                xb = x_ref[:, pl.ds(base, L)]
                yb, zz = block_step(xb, zz, TmT, GT, FT)
                x_ref[:, pl.ds(base, L)] = yb
                return zz
            z = lax.fori_loop(0, n_blocks, fwd, z, unroll=2)

        # value of the forward output at the last *real* sample
        y_last = x_ref[:, t_ext - 1:t_ext]             # (bt, 1)

        # Fill the padded tail with y_last: since zi is the fixed point of the
        # recursion for a constant input, the backward recursion over this
        # constant tail (initial state zi*y_last) reaches t_ext-1 with state
        # exactly zi*y_last -- scipy filtfilt's backward initial condition.
        if pad_tail > 0:
            x_ref[:, t_ext:t_pad] = jnp.broadcast_to(y_last, (bt, pad_tail))

        # ---- backward pass (zero phase), in place ---------------------------
        z = zi * y_last

        if unrolled:
            for i in range(n_blocks):
                base = (n_blocks - 1 - i) * L
                yb0 = x_ref[:, base:base + L]
                yb, z = block_step(yb0, z, TrT, GrT, FrT)
                x_ref[:, base:base + L] = yb
        else:
            def bwd(i, zz):
                base = pl.multiple_of((n_blocks - 1 - i) * L, 128)
                yb0 = x_ref[:, pl.ds(base, L)]
                yb, zz = block_step(yb0, zz, TrT, GrT, FrT)
                x_ref[:, pl.ds(base, L)] = yb
                return zz
            z = lax.fori_loop(0, n_blocks, bwd, z, unroll=2)

        # ---- epilogue: de-pad, truncate/pad to out_len, standardize ---------
        y = x_ref[:, padlen:padlen + keep]             # (bt, keep)
        if normalize:
            # mean/var over out_len samples (pad region is zeros).
            mean = jnp.sum(y, axis=1, keepdims=True) * inv_n
            d = y - mean
            ss = jnp.sum(d * d, axis=1, keepdims=True)
            if pad_out > 0:
                ss = ss + float(pad_out) * (mean * mean)
            var = ss * inv_denom
            ok = var > 0.0
            inv = lax.rsqrt(jnp.where(ok, var, 1.0))   # NaN-safe
            o_ref[:, :keep] = jnp.where(ok, d * inv, y)
            if pad_out > 0:
                padv = jnp.where(ok, -mean * inv, jnp.zeros_like(mean))
                o_ref[:, keep:] = jnp.broadcast_to(padv, (bt, pad_out))
        else:
            o_ref[:, :keep] = y
            if pad_out > 0:
                o_ref[:, keep:] = jnp.zeros((bt, pad_out), jnp.float32)

    return kernel


def _normalize_kernel(x_ref, o_ref):
    # (bt, L): per-row (x - mean) * rsqrt(var), unbiased var, std > 0 guard.
    # Only used on the filter_signals=False path (grid-tiled over batch).
    x = x_ref[...]
    n = x.shape[1]
    inv_denom = 1.0 / float(max(n - 1, 1))
    mean = jnp.mean(x, axis=1, keepdims=True)
    d = x - mean
    var = jnp.sum(d * d, axis=1, keepdims=True) * inv_denom
    ok = var > 0.0
    inv = lax.rsqrt(jnp.where(ok, var, 1.0))
    o_ref[...] = jnp.where(ok, d * inv, x)


# ----------------------------------------------------------------------------
# Wrapper (glue)
# ----------------------------------------------------------------------------
def hr_preprocess(signals, *, sample_rate=256, target_length=None,
                  normalize=True, filter_signals=True,
                  lowcut=0.5, highcut=4.0,
                  block_len=None, batch_tile=None):
    """JAX/Pallas equivalent of HRPreprocessor.forward (sample_rates=None).

    block_len:  samples per state-space block (lane-aligned, multiple of 128).
                Defaults: 128 on v5-class chips, 256 on v6e/v7x.
    batch_tile: rows per grid step (multiple of 8).  Defaults: auto.
    """
    signals = jnp.asarray(signals, jnp.float32)
    if signals.ndim == 1:
        signals = signals[None, :]
    bsz, tlen = signals.shape
    default_len = 256 if target_length is None else target_length
    if bsz == 0:
        return jnp.zeros((0, default_len), jnp.float32)

    gen = _tpu_generation()

    # TODO(synk): the optional per-signal resampling branch (sample_rates !=
    # self.sample_rate, torch F.interpolate) and ragged list-of-signal padding
    # are host-side glue in the original module and are not ported here.

    if not filter_signals:
        out = signals
        if target_length is not None:
            cur = out.shape[1]
            if cur < target_length:
                out = jnp.pad(out, ((0, 0), (0, target_length - cur)))
            elif cur > target_length:
                out = out[:, :target_length]
        if normalize:
            sig_len = out.shape[1]
            b8 = _round_up(bsz, 8)
            tile_b = 256 if b8 >= 256 else b8
            b_pad = _round_up(bsz, tile_b)
            out_p = jnp.pad(out, ((0, b_pad - bsz), (0, 0)))
            out = pl.pallas_call(
                _normalize_kernel,
                out_shape=jax.ShapeDtypeStruct((b_pad, sig_len), jnp.float32),
                grid=(b_pad // tile_b,),
                in_specs=[pl.BlockSpec((tile_b, sig_len), lambda i: (i, 0))],
                out_specs=pl.BlockSpec((tile_b, sig_len), lambda i: (i, 0)),
                compiler_params=pltpu.CompilerParams(
                    dimension_semantics=("parallel",)),
            )(out_p)[:bsz]
        return out

    # ---- filter design (float64, deterministic) -----------------------------
    b, a = _butter_bandpass(lowcut, highcut, sample_rate, order=4)
    zi = _lfilter_zi(b, a)
    padlen = 3 * max(len(a), len(b))          # scipy filtfilt default (= 27)
    assert tlen > padlen, "signal too short for filtfilt padding"

    t_ext = tlen + 2 * padlen
    out_len = tlen if target_length is None else target_length
    keep = min(tlen, out_len)

    # Block length (time lives on lanes -> multiple of 128).
    if block_len is None:
        block_len = 128 if (gen is not None and gen <= 5) else 256
    L = min(max(128, _round_up(int(block_len), 128)), _round_up(t_ext, 128))
    n_blocks = int(pl.cdiv(t_ext, L))
    t_pad = n_blocks * L

    # Batch tile (batch lives on sublanes -> multiple of 8).
    b8 = _round_up(bsz, 8)
    if batch_tile is None:
        n_tiles = _cdiv(b8, 256)
        if gen is not None and gen >= 7 and b8 > 8:
            n_tiles = max(n_tiles, 2)          # keep both v7x TCs busy
        bt = _round_up(_cdiv(b8, n_tiles), 8)
    else:
        bt = min(max(8, _round_up(int(batch_tile), 8)), b8)

    # Precomputed f64 block matrices (f32 mantissa drift for very narrow bands
    # is inherited from the single-section (b, a) realization of the reference
    # module; a SOS cascade would be the fix if tighter parity is needed).
    mats = _block_ss_matrices(b, a, L)
    m = len(zi)
    consts_np = [mats["Tm"].T, mats["Tr"].T, mats["G"].T, mats["Gr"].T,
                 mats["AL"].T, mats["F"].T, mats["Fr"].T]
    consts = [jnp.asarray(c, jnp.float32) for c in consts_np]
    zi_row = jnp.asarray(np.asarray(zi, np.float64).reshape(1, m), jnp.float32)
    const_bytes = 4 * (sum(int(np.prod(c.shape)) for c in consts) + m)

    # ---- VMEM budget (generation-aware; in-place filtering, no scratch) -----
    vmem_cap = _vmem_capacity_bytes(gen)
    budget = max(min(int(vmem_cap * 0.75), vmem_cap - (8 << 20)), 16 << 20)

    def _tile_bytes(bt_):
        # 2x double-buffered input tiles + 2x output tiles + 2x constants
        return 4 * (2 * bt_ * t_pad + 2 * bt_ * out_len) + 2 * const_bytes

    while bt > 8 and _tile_bytes(bt) + (2 << 20) > budget:
        bt = max(8, _round_up(bt // 2, 8))
    # TODO(synk): for signals so long that even bt=8 exceeds the budget, a
    # manual time-streaming variant (memory_space=pl.ANY + make_async_copy)
    # would be needed; not implemented here.

    b_pad = _round_up(bsz, bt)
    vmem_limit = int(min(budget, max(16 << 20, _tile_bytes(bt) + (4 << 20))))

    # odd extension (scipy filtfilt padtype='odd'), batch-major, zero tail pad
    left = 2.0 * signals[:, :1] - signals[:, padlen:0:-1]
    right = 2.0 * signals[:, -1:] - signals[:, -2:-(padlen + 2):-1]
    x_ext = jnp.concatenate([left, signals, right], axis=1)          # (B, t_ext)
    x_pad = jnp.pad(x_ext, ((0, b_pad - bsz), (0, t_pad - t_ext)))   # (b_pad, t_pad)

    kernel = _make_filtfilt_norm_kernel(
        L=L, n_blocks=n_blocks, t_ext=t_ext, t_pad=t_pad, padlen=padlen,
        keep=keep, out_len=out_len, normalize=normalize, m=m)

    grid = (b_pad // bt,)
    in_specs = [pl.BlockSpec(c.shape, lambda i: (0, 0)) for c in consts]
    in_specs.append(pl.BlockSpec((1, m), lambda i: (0, 0)))           # zi
    in_specs.append(pl.BlockSpec((bt, t_pad), lambda i: (i, 0)))      # x (batch-major)

    flops = int(grid[0] * 2 * n_blocks * (2 * bt * L * L + 2 * bt * L * m))
    bytes_accessed = int(4 * (b_pad * t_pad + b_pad * out_len) + const_bytes)
    cost = pl.CostEstimate(flops=flops, transcendentals=int(b_pad),
                           bytes_accessed=bytes_accessed)

    out = pl.pallas_call(
        kernel,
        out_shape=jax.ShapeDtypeStruct((b_pad, out_len), jnp.float32),
        grid=grid,
        in_specs=in_specs,
        out_specs=pl.BlockSpec((bt, out_len), lambda i: (i, 0)),
        compiler_params=pltpu.CompilerParams(
            dimension_semantics=("parallel",),
            vmem_limit_bytes=vmem_limit),
        cost_estimate=cost,
    )(*consts, zi_row, x_pad)

    return out[:bsz]


# ----------------------------------------------------------------------------
# float64 reference (numpy) -- used only for the self-check in __main__
# ----------------------------------------------------------------------------
def _filtfilt_1d(row, b, a, zi, padlen):
    b = np.asarray(b, np.float64)
    a = np.asarray(a, np.float64)
    b = b / a[0]
    a = a / a[0]
    m = max(len(a), len(b)) - 1
    a = np.r_[a, np.zeros(m + 1 - len(a))]
    b = np.r_[b, np.zeros(m + 1 - len(b))]

    def lfilt(sig, z):
        z = np.asarray(z, np.float64).copy()
        y = np.empty_like(sig)
        for n in range(len(sig)):
            xn = sig[n]
            yn = b[0] * xn + z[0]
            for i in range(m - 1):
                z[i] = b[i + 1] * xn + z[i + 1] - a[i + 1] * yn
            z[m - 1] = b[m] * xn - a[m] * yn
            y[n] = yn
        return y

    left = 2.0 * row[0] - row[padlen:0:-1]
    right = 2.0 * row[-1] - row[-2:-(padlen + 2):-1]
    ext = np.concatenate([left, row, right])
    y = lfilt(ext, zi * ext[0])
    y = lfilt(y[::-1], zi * y[-1])[::-1]
    return y[padlen:len(ext) - padlen]


def _reference_forward(x, *, sample_rate, target_length, normalize,
                       filter_signals, lowcut, highcut):
    x = np.asarray(x, np.float64)
    if x.ndim == 1:
        x = x[None, :]
    if filter_signals:
        b, a = _butter_bandpass(lowcut, highcut, sample_rate, order=4)
        zi = _lfilter_zi(b, a)
        padlen = 3 * max(len(a), len(b))
        x = np.stack([_filtfilt_1d(r, b, a, zi, padlen) for r in x])
    if target_length is not None:
        cur = x.shape[1]
        if cur < target_length:
            x = np.pad(x, ((0, 0), (0, target_length - cur)))
        elif cur > target_length:
            x = x[:, :target_length]
    if normalize:
        y = x.copy()
        for i in range(x.shape[0]):
            s = x[i].std(ddof=1)
            if s > 0:
                y[i] = (x[i] - x[i].mean()) / s
        x = y
    return x


if __name__ == "__main__":
    key = jax.random.PRNGKey(0)
    B, T = 4, 160
    sample_rate = 32
    target_length = 128

    signals = jax.random.normal(key, (B, T), dtype=jnp.float32)

    # block_len=128 => 2 state-carrying blocks (exercises the block IIR carry).
    out = hr_preprocess(signals, sample_rate=sample_rate,
                        target_length=target_length, normalize=True,
                        filter_signals=True, lowcut=0.5, highcut=4.0,
                        block_len=128)
    out = jax.block_until_ready(out)
    assert out.shape == (B, target_length) and out.dtype == jnp.float32

    # Self-check against a float64 serial filtfilt + normalize reference.
    # Typical error is ~1e-5; the loose bound only guards structural bugs.
    ref = _reference_forward(np.asarray(signals, np.float64),
                             sample_rate=sample_rate,
                             target_length=target_length,
                             normalize=True, filter_signals=True,
                             lowcut=0.5, highcut=4.0)
    out_np = np.asarray(out, np.float64)
    rel = np.linalg.norm(out_np - ref) / max(np.linalg.norm(ref), 1e-12)
    assert np.isfinite(rel) and rel < 5e-2, f"mismatch vs f64 reference: {rel}"
    print("KERNEL_OK")
</pallas_src>

<mosaic_0001>
module attributes {stable_mosaic.version = 11 : i64} {
  func.func @kernel(%arg0: i32, %arg1: memref<128x128xf32, #tpu.memory_space<vmem>>, %arg2: memref<128x128xf32, #tpu.memory_space<vmem>>, %arg3: memref<8x128xf32, #tpu.memory_space<vmem>>, %arg4: memref<8x128xf32, #tpu.memory_space<vmem>>, %arg5: memref<8x8xf32, #tpu.memory_space<vmem>>, %arg6: memref<128x8xf32, #tpu.memory_space<vmem>>, %arg7: memref<128x8xf32, #tpu.memory_space<vmem>>, %arg8: memref<1x8xf32, #tpu.memory_space<vmem>>, %arg9: memref<8x256xf32, #tpu.memory_space<vmem>>, %arg10: memref<8x128xf32, #tpu.memory_space<vmem>>) attributes {dimension_semantics = [#tpu.dimension_semantics<parallel>], iteration_bounds = array<i64: 1>, scalar_prefetch = 0 : i64, scratch_operands = 0 : i64, tpu.core_type = #tpu.core_type<tc>, window_params = [{pipeline_mode = #tpu.pipeline_mode<synchronous>, transform_indices = @transform_0, window_bounds = array<i64: 128, 128>}, {pipeline_mode = #tpu.pipeline_mode<synchronous>, transform_indices = @transform_1, window_bounds = array<i64: 128, 128>}, {pipeline_mode = #tpu.pipeline_mode<synchronous>, transform_indices = @transform_2, window_bounds = array<i64: 8, 128>}, {pipeline_mode = #tpu.pipeline_mode<synchronous>, transform_indices = @transform_3, window_bounds = array<i64: 8, 128>}, {pipeline_mode = #tpu.pipeline_mode<synchronous>, transform_indices = @transform_4, window_bounds = array<i64: 8, 8>}, {pipeline_mode = #tpu.pipeline_mode<synchronous>, transform_indices = @transform_5, window_bounds = array<i64: 128, 8>}, {pipeline_mode = #tpu.pipeline_mode<synchronous>, transform_indices = @transform_6, window_bounds = array<i64: 128, 8>}, {pipeline_mode = #tpu.pipeline_mode<synchronous>, transform_indices = @transform_7, window_bounds = array<i64: 1, 8>}, {transform_indices = @transform_8, window_bounds = array<i64: 8, 256>}, {transform_indices = @transform_9, window_bounds = array<i64: 8, 128>}]} {
    %c0 = arith.constant 0 : index
    %c0_0 = arith.constant 0 : index
    %0 = vector.load %arg1[%c0, %c0_0] : memref<128x128xf32, #tpu.memory_space<vmem>>, vector<128x128xf32>
    %c0_1 = arith.constant 0 : index
    %c0_2 = arith.constant 0 : index
    %1 = vector.load %arg2[%c0_1, %c0_2] : memref<128x128xf32, #tpu.memory_space<vmem>>, vector<128x128xf32>
    %c0_3 = arith.constant 0 : index
    %c0_4 = arith.constant 0 : index
    %2 = vector.load %arg3[%c0_3, %c0_4] : memref<8x128xf32, #tpu.memory_space<vmem>>, vector<8x128xf32>
    %c0_5 = arith.constant 0 : index
    %c0_6 = arith.constant 0 : index
    %3 = vector.load %arg4[%c0_5, %c0_6] : memref<8x128xf32, #tpu.memory_space<vmem>>, vector<8x128xf32>
    %c0_7 = arith.constant 0 : index
    %c0_8 = arith.constant 0 : index
    %4 = vector.load %arg5[%c0_7, %c0_8] : memref<8x8xf32, #tpu.memory_space<vmem>>, vector<8x8xf32>
    %c0_9 = arith.constant 0 : index
    %c0_10 = arith.constant 0 : index
    %5 = vector.load %arg6[%c0_9, %c0_10] : memref<128x8xf32, #tpu.memory_space<vmem>>, vector<128x8xf32>
    %c0_11 = arith.constant 0 : index
    %c0_12 = arith.constant 0 : index
    %6 = vector.load %arg7[%c0_11, %c0_12] : memref<128x8xf32, #tpu.memory_space<vmem>>, vector<128x8xf32>
    %c0_13 = arith.constant 0 : index
    %c0_14 = arith.constant 0 : index
    %7 = vector.load %arg8[%c0_13, %c0_14] : memref<1x8xf32, #tpu.memory_space<vmem>>, vector<1x8xf32>
    %c0_15 = arith.constant 0 : index
    %c0_16 = arith.constant 0 : index
    %8 = vector.load %arg9[%c0_15, %c0_16] : memref<8x256xf32, #tpu.memory_space<vmem>>, vector<8x1xf32>
    %9 = vector.broadcast %7 : vector<1x8xf32> to vector<8x8xf32>
    %10 = vector.broadcast %8 : vector<8x1xf32> to vector<8x8xf32>
    %11 = arith.mulf %9, %10 : vector<8x8xf32>
    %c0_17 = arith.constant 0 : index
    %c0_18 = arith.constant 0 : index
    %12 = vector.load %arg9[%c0_17, %c0_18] : memref<8x256xf32, #tpu.memory_space<vmem>>, vector<8x128xf32>
    %cst = arith.constant dense<0.000000e+00> : vector<8x128xf32>
    %13 = tpu.matmul %12, %0, %cst {dimension_numbers = #tpu.dot_dimension_numbers<[1], [0], [0], [1], [0, 0, 1, 1], [], []>} : vector<8x128xf32>, vector<128x128xf32>, vector<8x128xf32> -> vector<8x128xf32>
    %14 = vector.extract_strided_slice %11 {offsets = [0, 0], sizes = [8, 1], strides = [1, 1]} : vector<8x8xf32> to vector<8x1xf32>
    %15 = vector.extract_strided_slice %2 {offsets = [0, 0], sizes = [1, 128], strides = [1, 1]} : vector<8x128xf32> to vector<1x128xf32>
    %16 = vector.broadcast %14 : vector<8x1xf32> to vector<8x128xf32>
    %17 = vector.broadcast %15 : vector<1x128xf32> to vector<8x128xf32>
    %18 = arith.mulf %16, %17 : vector<8x128xf32>
    %19 = vector.extract_strided_slice %11 {offsets = [0, 1], sizes = [8, 1], strides = [1, 1]} : vector<8x8xf32> to vector<8x1xf32>
    %20 = vector.extract_strided_slice %2 {offsets = [1, 0], sizes = [1, 128], strides = [1, 1]} : vector<8x128xf32> to vector<1x128xf32>
    %21 = vector.broadcast %19 : vector<8x1xf32> to vector<8x128xf32>
    %22 = vector.broadcast %20 : vector<1x128xf32> to vector<8x128xf32>
    %23 = arith.mulf %21, %22 : vector<8x128xf32>
    %24 = arith.addf %18, %23 : vector<8x128xf32>
    %25 = vector.extract_strided_slice %11 {offsets = [0, 2], sizes = [8, 1], strides = [1, 1]} : vector<8x8xf32> to vector<8x1xf32>
    %26 = vector.extract_strided_slice %2 {offsets = [2, 0], sizes = [1, 128], strides = [1, 1]} : vector<8x128xf32> to vector<1x128xf32>
    %27 = vector.broadcast %25 : vector<8x1xf32> to vector<8x128xf32>
    %28 = vector.broadcast %26 : vector<1x128xf32> to vector<8x128xf32>
    %29 = arith.mulf %27, %28 : vector<8x128xf32>
    %30 = arith.addf %24, %29 : vector<8x128xf32>
    %31 = vector.extract_strided_slice %11 {offsets = [0, 3], sizes = [8, 1], strides = [1, 1]} : vector<8x8xf32> to vector<8x1xf32>
    %32 = vector.extract_strided_slice %2 {offsets = [3, 0], sizes = [1, 128], strides = [1, 1]} : vector<8x128xf32> to vector<1x128xf32>
    %33 = vector.broadcast %31 : vector<8x1xf32> to vector<8x128xf32>
    %34 = vector.broadcast %32 : vector<1x128xf32> to vector<8x128xf32>
    %35 = arith.mulf %33, %34 : vector<8x128xf32>
    %36 = arith.addf %30, %35 : vector<8x128xf32>
    %37 = vector.extract_strided_slice %11 {offsets = [0, 4], sizes = [8, 1], strides = [1, 1]} : vector<8x8xf32> to vector<8x1xf32>
    %38 = vector.extract_strided_slice %2 {offsets = [4, 0], sizes = [1, 128], strides = [1, 1]} : vector<8x128xf32> to vector<1x128xf32>
    %39 = vector.broadcast %37 : vector<8x1xf32> to vector<8x128xf32>
    %40 = vector.broadcast %38 : vector<1x128xf32> to vector<8x128xf32>
    %41 = arith.mulf %39, %40 : vector<8x128xf32>
    %42 = arith.addf %36, %41 : vector<8x128xf32>
    %43 = vector.extract_strided_slice %11 {offsets = [0, 5], sizes = [8, 1], strides = [1, 1]} : vector<8x8xf32> to vector<8x1xf32>
    %44 = vector.extract_strided_slice %2 {offsets = [5, 0], sizes = [1, 128], strides = [1, 1]} : vector<8x128xf32> to vector<1x128xf32>
    %45 = vector.broadcast %43 : vector<8x1xf32> to vector<8x128xf32>
    %46 = vector.broadcast %44 : vector<1x128xf32> to vector<8x128xf32>
    %47 = arith.mulf %45, %46 : vector<8x128xf32>
    %48 = arith.addf %42, %47 : vector<8x128xf32>
    %49 = vector.extract_strided_slice %11 {offsets = [0, 6], sizes = [8, 1], strides = [1, 1]} : vector<8x8xf32> to vector<8x1xf32>
    %50 = vector.extract_strided_slice %2 {offsets = [6, 0], sizes = [1, 128], strides = [1, 1]} : vector<8x128xf32> to vector<1x128xf32>
    %51 = vector.broadcast %49 : vector<8x1xf32> to vector<8x128xf32>
    %52 = vector.broadcast %50 : vector<1x128xf32> to vector<8x128xf32>
    %53 = arith.mulf %51, %52 : vector<8x128xf32>
    %54 = arith.addf %48, %53 : vector<8x128xf32>
    %55 = vector.extract_strided_slice %11 {offsets = [0, 7], sizes = [8, 1], strides = [1, 1]} : vector<8x8xf32> to vector<8x1xf32>
    %56 = vector.extract_strided_slice %2 {offsets = [7, 0], sizes = [1, 128], strides = [1, 1]} : vector<8x128xf32> to vector<1x128xf32>
    %57 = vector.broadcast %55 : vector<8x1xf32> to vector<8x128xf32>
    %58 = vector.broadcast %56 : vector<1x128xf32> to vector<8x128xf32>
    %59 = arith.mulf %57, %58 : vector<8x128xf32>
    %60 = arith.addf %54, %59 : vector<8x128xf32>
    %61 = arith.addf %13, %60 : vector<8x128xf32>
    %62 = vector.extract_strided_slice %11 {offsets = [0, 0], sizes = [8, 1], strides = [1, 1]} : vector<8x8xf32> to vector<8x1xf32>
    %63 = vector.extract_strided_slice %4 {offsets = [0, 0], sizes = [1, 8], strides = [1, 1]} : vector<8x8xf32> to vector<1x8xf32>
    %64 = vector.broadcast %62 : vector<8x1xf32> to vector<8x8xf32>
    %65 = vector.broadcast %63 : vector<1x8xf32> to vector<8x8xf32>
    %66 = arith.mulf %64, %65 : vector<8x8xf32>
    %67 = vector.extract_strided_slice %11 {offsets = [0, 1], sizes = [8, 1], strides = [1, 1]} : vector<8x8xf32> to vector<8x1xf32>
    %68 = vector.extract_strided_slice %4 {offsets = [1, 0], sizes = [1, 8], strides = [1, 1]} : vector<8x8xf32> to vector<1x8xf32>
    %69 = vector.broadcast %67 : vector<8x1xf32> to vector<8x8xf32>
    %70 = vector.broadcast %68 : vector<1x8xf32> to vector<8x8xf32>
    %71 = arith.mulf %69, %70 : vector<8x8xf32>
    %72 = arith.addf %66, %71 : vector<8x8xf32>
    %73 = vector.extract_strided_slice %11 {offsets = [0, 2], sizes = [8, 1], strides = [1, 1]} : vector<8x8xf32> to vector<8x1xf32>
    %74 = vector.extract_strided_slice %4 {offsets = [2, 0], sizes = [1, 8], strides = [1, 1]} : vector<8x8xf32> to vector<1x8xf32>
    %75 = vector.broadcast %73 : vector<8x1xf32> to vector<8x8xf32>
    %76 = vector.broadcast %74 : vector<1x8xf32> to vector<8x8xf32>
    %77 = arith.mulf %75, %76 : vector<8x8xf32>
    %78 = arith.addf %72, %77 : vector<8x8xf32>
    %79 = vector.extract_strided_slice %11 {offsets = [0, 3], sizes = [8, 1], strides = [1, 1]} : vector<8x8xf32> to vector<8x1xf32>
    %80 = vector.extract_strided_slice %4 {offsets = [3, 0], sizes = [1, 8], strides = [1, 1]} : vector<8x8xf32> to vector<1x8xf32>
    %81 = vector.broadcast %79 : vector<8x1xf32> to vector<8x8xf32>
    %82 = vector.broadcast %80 : vector<1x8xf32> to vector<8x8xf32>
    %83 = arith.mulf %81, %82 : vector<8x8xf32>
    %84 = arith.addf %78, %83 : vector<8x8xf32>
    %85 = vector.extract_strided_slice %11 {offsets = [0, 4], sizes = [8, 1], strides = [1, 1]} : vector<8x8xf32> to vector<8x1xf32>
    %86 = vector.extract_strided_slice %4 {offsets = [4, 0], sizes = [1, 8], strides = [1, 1]} : vector<8x8xf32> to vector<1x8xf32>
    %87 = vector.broadcast %85 : vector<8x1xf32> to vector<8x8xf32>
    %88 = vector.broadcast %86 : vector<1x8xf32> to vector<8x8xf32>
    %89 = arith.mulf %87, %88 : vector<8x8xf32>
    %90 = arith.addf %84, %89 : vector<8x8xf32>
    %91 = vector.extract_strided_slice %11 {offsets = [0, 5], sizes = [8, 1], strides = [1, 1]} : vector<8x8xf32> to vector<8x1xf32>
    %92 = vector.extract_strided_slice %4 {offsets = [5, 0], sizes = [1, 8], strides = [1, 1]} : vector<8x8xf32> to vector<1x8xf32>
    %93 = vector.broadcast %91 : vector<8x1xf32> to vector<8x8xf32>
    %94 = vector.broadcast %92 : vector<1x8xf32> to vector<8x8xf32>
    %95 = arith.mulf %93, %94 : vector<8x8xf32>
    %96 = arith.addf %90, %95 : vector<8x8xf32>
    %97 = vector.extract_strided_slice %11 {offsets = [0, 6], sizes = [8, 1], strides = [1, 1]} : vector<8x8xf32> to vector<8x1xf32>
    %98 = vector.extract_strided_slice %4 {offsets = [6, 0], sizes = [1, 8], strides = [1, 1]} : vector<8x8xf32> to vector<1x8xf32>
    %99 = vector.broadcast %97 : vector<8x1xf32> to vector<8x8xf32>
    %100 = vector.broadcast %98 : vector<1x8xf32> to vector<8x8xf32>
    %101 = arith.mulf %99, %100 : vector<8x8xf32>
    %102 = arith.addf %96, %101 : vector<8x8xf32>
    %103 = vector.extract_strided_slice %11 {offsets = [0, 7], sizes = [8, 1], strides = [1, 1]} : vector<8x8xf32> to vector<8x1xf32>
    %104 = vector.extract_strided_slice %4 {offsets = [7, 0], sizes = [1, 8], strides = [1, 1]} : vector<8x8xf32> to vector<1x8xf32>
    %105 = vector.broadcast %103 : vector<8x1xf32> to vector<8x8xf32>
    %106 = vector.broadcast %104 : vector<1x8xf32> to vector<8x8xf32>
    %107 = arith.mulf %105, %106 : vector<8x8xf32>
    %108 = arith.addf %102, %107 : vector<8x8xf32>
    %cst_19 = arith.constant dense<0.000000e+00> : vector<8x8xf32>
    %109 = tpu.matmul %12, %5, %cst_19 {dimension_numbers = #tpu.dot_dimension_numbers<[1], [0], [0], [1], [0, 0, 1, 1], [], []>} : vector<8x128xf32>, vector<128x8xf32>, vector<8x8xf32> -> vector<8x8xf32>
    %110 = arith.addf %108, %109 : vector<8x8xf32>
    %c0_20 = arith.constant 0 : index
    %c0_21 = arith.constant 0 : index
    %111 = vector.load %arg9[%c0_20, %c0_21] : memref<8x256xf32, #tpu.memory_space<vmem>>, vector<8x128xf32>
    tpu.vector_store %arg9[%c0_20, %c0_21], %61 {strides = array<i32>} : memref<8x256xf32, #tpu.memory_space<vmem>>, vector<8x128xf32>,
    %c0_22 = arith.constant 0 : index
    %c128 = arith.constant 128 : index
    %112 = vector.load %arg9[%c0_22, %c128] : memref<8x256xf32, #tpu.memory_space<vmem>>, vector<8x128xf32>
    %cst_23 = arith.constant dense<0.000000e+00> : vector<8x128xf32>
    %113 = tpu.matmul %112, %0, %cst_23 {dimension_numbers = #tpu.dot_dimension_numbers<[1], [0], [0], [1], [0, 0, 1, 1], [], []>} : vector<8x128xf32>, vector<128x128xf32>, vector<8x128xf32> -> vector<8x128xf32>
    %114 = vector.extract_strided_slice %110 {offsets = [0, 0], sizes = [8, 1], strides = [1, 1]} : vector<8x8xf32> to vector<8x1xf32>
    %115 = vector.extract_strided_slice %2 {offsets = [0, 0], sizes = [1, 128], strides = [1, 1]} : vector<8x128xf32> to vector<1x128xf32>
    %116 = vector.broadcast %114 : vector<8x1xf32> to vector<8x128xf32>
    %117 = vector.broadcast %115 : vector<1x128xf32> to vector<8x128xf32>
    %118 = arith.mulf %116, %117 : vector<8x128xf32>
    %119 = vector.extract_strided_slice %110 {offsets = [0, 1], sizes = [8, 1], strides = [1, 1]} : vector<8x8xf32> to vector<8x1xf32>
    %120 = vector.extract_strided_slice %2 {offsets = [1, 0], sizes = [1, 128], strides = [1, 1]} : vector<8x128xf32> to vector<1x128xf32>
    %121 = vector.broadcast %119 : vector<8x1xf32> to vector<8x128xf32>
    %122 = vector.broadcast %120 : vector<1x128xf32> to vector<8x128xf32>
    %123 = arith.mulf %121, %122 : vector<8x128xf32>
    %124 = arith.addf %118, %123 : vector<8x128xf32>
    %125 = vector.extract_strided_slice %110 {offsets = [0, 2], sizes = [8, 1], strides = [1, 1]} : vector<8x8xf32> to vector<8x1xf32>
    %126 = vector.extract_strided_slice %2 {offsets = [2, 0], sizes = [1, 128], strides = [1, 1]} : vector<8x128xf32> to vector<1x128xf32>
    %127 = vector.broadcast %125 : vector<8x1xf32> to vector<8x128xf32>
    %128 = vector.broadcast %126 : vector<1x128xf32> to vector<8x128xf32>
    %129 = arith.mulf %127, %128 : vector<8x128xf32>
    %130 = arith.addf %124, %129 : vector<8x128xf32>
    %131 = vector.extract_strided_slice %110 {offsets = [0, 3], sizes = [8, 1], strides = [1, 1]} : vector<8x8xf32> to vector<8x1xf32>
    %132 = vector.extract_strided_slice %2 {offsets = [3, 0], sizes = [1, 128], strides = [1, 1]} : vector<8x128xf32> to vector<1x128xf32>
    %133 = vector.broadcast %131 : vector<8x1xf32> to vector<8x128xf32>
    %134 = vector.broadcast %132 : vector<1x128xf32> to vector<8x128xf32>
    %135 = arith.mulf %133, %134 : vector<8x128xf32>
    %136 = arith.addf %130, %135 : vector<8x128xf32>
    %137 = vector.extract_strided_slice %110 {offsets = [0, 4], sizes = [8, 1], strides = [1, 1]} : vector<8x8xf32> to vector<8x1xf32>
    %138 = vector.extract_strided_slice %2 {offsets = [4, 0], sizes = [1, 128], strides = [1, 1]} : vector<8x128xf32> to vector<1x128xf32>
    %139 = vector.broadcast %137 : vector<8x1xf32> to vector<8x128xf32>
    %140 = vector.broadcast %138 : vector<1x128xf32> to vector<8x128xf32>
    %141 = arith.mulf %139, %140 : vector<8x128xf32>
    %142 = arith.addf %136, %141 : vector<8x128xf32>
    %143 = vector.extract_strided_slice %110 {offsets = [0, 5], sizes = [8, 1], strides = [1, 1]} : vector<8x8xf32> to vector<8x1xf32>
    %144 = vector.extract_strided_slice %2 {offsets = [5, 0], sizes = [1, 128], strides = [1, 1]} : vector<8x128xf32> to vector<1x128xf32>
    %145 = vector.broadcast %143 : vector<8x1xf32> to vector<8x128xf32>
    %146 = vector.broadcast %144 : vector<1x128xf32> to vector<8x128xf32>
    %147 = arith.mulf %145, %146 : vector<8x128xf32>
    %148 = arith.addf %142, %147 : vector<8x128xf32>
    %149 = vector.extract_strided_slice %110 {offsets = [0, 6], sizes = [8, 1], strides = [1, 1]} : vector<8x8xf32> to vector<8x1xf32>
    %150 = vector.extract_strided_slice %2 {offsets = [6, 0], sizes = [1, 128], strides = [1, 1]} : vector<8x128xf32> to vector<1x128xf32>
    %151 = vector.broadcast %149 : vector<8x1xf32> to vector<8x128xf32>
    %152 = vector.broadcast %150 : vector<1x128xf32> to vector<8x128xf32>
    %153 = arith.mulf %151, %152 : vector<8x128xf32>
    %154 = arith.addf %148, %153 : vector<8x128xf32>
    %155 = vector.extract_strided_slice %110 {offsets = [0, 7], sizes = [8, 1], strides = [1, 1]} : vector<8x8xf32> to vector<8x1xf32>
    %156 = vector.extract_strided_slice %2 {offsets = [7, 0], sizes = [1, 128], strides = [1, 1]} : vector<8x128xf32> to vector<1x128xf32>
    %157 = vector.broadcast %155 : vector<8x1xf32> to vector<8x128xf32>
    %158 = vector.broadcast %156 : vector<1x128xf32> to vector<8x128xf32>
    %159 = arith.mulf %157, %158 : vector<8x128xf32>
    %160 = arith.addf %154, %159 : vector<8x128xf32>
    %161 = arith.addf %113, %160 : vector<8x128xf32>
    %c0_24 = arith.constant 0 : index
    %c128_25 = arith.constant 128 : index
    %162 = vector.load %arg9[%c0_24, %c128_25] : memref<8x256xf32, #tpu.memory_space<vmem>>, vector<8x128xf32>
    tpu.vector_store %arg9[%c0_24, %c128_25], %161 {strides = array<i32>} : memref<8x256xf32, #tpu.memory_space<vmem>>, vector<8x128xf32>,
    %c0_26 = arith.constant 0 : index
    %c213 = arith.constant 213 : index
    %163 = vector.load %arg9[%c0_26, %c213] : memref<8x256xf32, #tpu.memory_space<vmem>>, vector<8x1xf32>
    %164 = vector.shape_cast %163 : vector<8x1xf32> to vector<8x1xf32>
    %165 = vector.broadcast %164 : vector<8x1xf32> to vector<8x42xf32>
    %c0_27 = arith.constant 0 : index
    %c214 = arith.constant 214 : index
    %166 = vector.load %arg9[%c0_27, %c214] : memref<8x256xf32, #tpu.memory_space<vmem>>, vector<8x42xf32>
    tpu.vector_store %arg9[%c0_27, %c214], %165 {strides = array<i32>} : memref<8x256xf32, #tpu.memory_space<vmem>>, vector<8x42xf32>,
    %167 = vector.broadcast %7 : vector<1x8xf32> to vector<8x8xf32>
    %168 = vector.broadcast %163 : vector<8x1xf32> to vector<8x8xf32>
    %169 = arith.mulf %167, %168 : vector<8x8xf32>
    %c0_28 = arith.constant 0 : index
    %c128_29 = arith.constant 128 : index
    %170 = vector.load %arg9[%c0_28, %c128_29] : memref<8x256xf32, #tpu.memory_space<vmem>>, vector<8x128xf32>
    %cst_30 = arith.constant dense<0.000000e+00> : vector<8x128xf32>
    %171 = tpu.matmul %170, %1, %cst_30 {dimension_numbers = #tpu.dot_dimension_numbers<[1], [0], [0], [1], [0, 0, 1, 1], [], []>} : vector<8x128xf32>, vector<128x128xf32>, vector<8x128xf32> -> vector<8x128xf32>
    %172 = vector.extract_strided_slice %169 {offsets = [0, 0], sizes = [8, 1], strides = [1, 1]} : vector<8x8xf32> to vector<8x1xf32>
    %173 = vector.extract_strided_slice %3 {offsets = [0, 0], sizes = [1, 128], strides = [1, 1]} : vector<8x128xf32> to vector<1x128xf32>
    %174 = vector.broadcast %172 : vector<8x1xf32> to vector<8x128xf32>
    %175 = vector.broadcast %173 : vector<1x128xf32> to vector<8x128xf32>
    %176 = arith.mulf %174, %175 : vector<8x128xf32>
    %177 = vector.extract_strided_slice %169 {offsets = [0, 1], sizes = [8, 1], strides = [1, 1]} : vector<8x8xf32> to vector<8x1xf32>
    %178 = vector.extract_strided_slice %3 {offsets = [1, 0], sizes = [1, 128], strides = [1, 1]} : vector<8x128xf32> to vector<1x128xf32>
    %179 = vector.broadcast %177 : vector<8x1xf32> to vector<8x128xf32>
    %180 = vector.broadcast %178 : vector<1x128xf32> to vector<8x128xf32>
    %181 = arith.mulf %179, %180 : vector<8x128xf32>
    %182 = arith.addf %176, %181 : vector<8x128xf32>
    %183 = vector.extract_strided_slice %169 {offsets = [0, 2], sizes = [8, 1], strides = [1, 1]} : vector<8x8xf32> to vector<8x1xf32>
    %184 = vector.extract_strided_slice %3 {offsets = [2, 0], sizes = [1, 128], strides = [1, 1]} : vector<8x128xf32> to vector<1x128xf32>
    %185 = vector.broadcast %183 : vector<8x1xf32> to vector<8x128xf32>
    %186 = vector.broadcast %184 : vector<1x128xf32> to vector<8x128xf32>
    %187 = arith.mulf %185, %186 : vector<8x128xf32>
    %188 = arith.addf %182, %187 : vector<8x128xf32>
    %189 = vector.extract_strided_slice %169 {offsets = [0, 3], sizes = [8, 1], strides = [1, 1]} : vector<8x8xf32> to vector<8x1xf32>
    %190 = vector.extract_strided_slice %3 {offsets = [3, 0], sizes = [1, 128], strides = [1, 1]} : vector<8x128xf32> to vector<1x128xf32>
    %191 = vector.broadcast %189 : vector<8x1xf32> to vector<8x128xf32>
    %192 = vector.broadcast %190 : vector<1x128xf32> to vector<8x128xf32>
    %193 = arith.mulf %191, %192 : vector<8x128xf32>
    %194 = arith.addf %188, %193 : vector<8x128xf32>
    %195 = vector.extract_strided_slice %169 {offsets = [0, 4], sizes = [8, 1], strides = [1, 1]} : vector<8x8xf32> to vector<8x1xf32>
    %196 = vector.extract_strided_slice %3 {offsets = [4, 0], sizes = [1, 128], strides = [1, 1]} : vector<8x128xf32> to vector<1x128xf32>
    %197 = vector.broadcast %195 : vector<8x1xf32> to vector<8x128xf32>
    %198 = vector.broadcast %196 : vector<1x128xf32> to vector<8x128xf32>
    %199 = arith.mulf %197, %198 : vector<8x128xf32>
    %200 = arith.addf %194, %199 : vector<8x128xf32>
    %201 = vector.extract_strided_slice %169 {offsets = [0, 5], sizes = [8, 1], strides = [1, 1]} : vector<8x8xf32> to vector<8x1xf32>
    %202 = vector.extract_strided_slice %3 {offsets = [5, 0], sizes = [1, 128], strides = [1, 1]} : vector<8x128xf32> to vector<1x128xf32>
    %203 = vector.broadcast %201 : vector<8x1xf32> to vector<8x128xf32>
    %204 = vector.broadcast %202 : vector<1x128xf32> to vector<8x128xf32>
    %205 = arith.mulf %203, %204 : vector<8x128xf32>
    %206 = arith.addf %200, %205 : vector<8x128xf32>
    %207 = vector.extract_strided_slice %169 {offsets = [0, 6], sizes = [8, 1], strides = [1, 1]} : vector<8x8xf32> to vector<8x1xf32>
    %208 = vector.extract_strided_slice %3 {offsets = [6, 0], sizes = [1, 128], strides = [1, 1]} : vector<8x128xf32> to vector<1x128xf32>
    %209 = vector.broadcast %207 : vector<8x1xf32> to vector<8x128xf32>
    %210 = vector.broadcast %208 : vector<1x128xf32> to vector<8x128xf32>
    %211 = arith.mulf %209, %210 : vector<8x128xf32>
    %212 = arith.addf %206, %211 : vector<8x128xf32>
    %213 = vector.extract_strided_slice %169 {offsets = [0, 7], sizes = [8, 1], strides = [1, 1]} : vector<8x8xf32> to vector<8x1xf32>
    %214 = vector.extract_strided_slice %3 {offsets = [7, 0], sizes = [1, 128], strides = [1, 1]} : vector<8x128xf32> to vector<1x128xf32>
    %215 = vector.broadcast %213 : vector<8x1xf32> to vector<8x128xf32>
    %216 = vector.broadcast %214 : vector<1x128xf32> to vector<8x128xf32>
    %217 = arith.mulf %215, %216 : vector<8x128xf32>
    %218 = arith.addf %212, %217 : vector<8x128xf32>
    %219 = arith.addf %171, %218 : vector<8x128xf32>
    %220 = vector.extract_strided_slice %169 {offsets = [0, 0], sizes = [8, 1], strides = [1, 1]} : vector<8x8xf32> to vector<8x1xf32>
    %221 = vector.extract_strided_slice %4 {offsets = [0, 0], sizes = [1, 8], strides = [1, 1]} : vector<8x8xf32> to vector<1x8xf32>
    %222 = vector.broadcast %220 : vector<8x1xf32> to vector<8x8xf32>
    %223 = vector.broadcast %221 : vector<1x8xf32> to vector<8x8xf32>
    %224 = arith.mulf %222, %223 : vector<8x8xf32>
    %225 = vector.extract_strided_slice %169 {offsets = [0, 1], sizes = [8, 1], strides = [1, 1]} : vector<8x8xf32> to vector<8x1xf32>
    %226 = vector.extract_strided_slice %4 {offsets = [1, 0], sizes = [1, 8], strides = [1, 1]} : vector<8x8xf32> to vector<1x8xf32>
    %227 = vector.broadcast %225 : vector<8x1xf32> to vector<8x8xf32>
    %228 = vector.broadcast %226 : vector<1x8xf32> to vector<8x8xf32>
    %229 = arith.mulf %227, %228 : vector<8x8xf32>
    %230 = arith.addf %224, %229 : vector<8x8xf32>
    %231 = vector.extract_strided_slice %169 {offsets = [0, 2], sizes = [8, 1], strides = [1, 1]} : vector<8x8xf32> to vector<8x1xf32>
    %232 = vector.extract_strided_slice %4 {offsets = [2, 0], sizes = [1, 8], strides = [1, 1]} : vector<8x8xf32> to vector<1x8xf32>
    %233 = vector.broadcast %231 : vector<8x1xf32> to vector<8x8xf32>
    %234 = vector.broadcast %232 : vector<1x8xf32> to vector<8x8xf32>
    %235 = arith.mulf %233, %234 : vector<8x8xf32>
    %236 = arith.addf %230, %235 : vector<8x8xf32>
    %237 = vector.extract_strided_slice %169 {offsets = [0, 3], sizes = [8, 1], strides = [1, 1]} : vector<8x8xf32> to vector<8x1xf32>
    %238 = vector.extract_strided_slice %4 {offsets = [3, 0], sizes = [1, 8], strides = [1, 1]} : vector<8x8xf32> to vector<1x8xf32>
    %239 = vector.broadcast %237 : vector<8x1xf32> to vector<8x8xf32>
    %240 = vector.broadcast %238 : vector<1x8xf32> to vector<8x8xf32>
    %241 = arith.mulf %239, %240 : vector<8x8xf32>
    %242 = arith.addf %236, %241 : vector<8x8xf32>
    %243 = vector.extract_strided_slice %169 {offsets = [0, 4], sizes = [8, 1], strides = [1, 1]} : vector<8x8xf32> to vector<8x1xf32>
    %244 = vector.extract_strided_slice %4 {offsets = [4, 0], sizes = [1, 8], strides = [1, 1]} : vector<8x8xf32> to vector<1x8xf32>
    %245 = vector.broadcast %243 : vector<8x1xf32> to vector<8x8xf32>
    %246 = vector.broadcast %244 : vector<1x8xf32> to vector<8x8xf32>
    %247 = arith.mulf %245, %246 : vector<8x8xf32>
    %248 = arith.addf %242, %247 : vector<8x8xf32>
    %249 = vector.extract_strided_slice %169 {offsets = [0, 5], sizes = [8, 1], strides = [1, 1]} : vector<8x8xf32> to vector<8x1xf32>
    %250 = vector.extract_strided_slice %4 {offsets = [5, 0], sizes = [1, 8], strides = [1, 1]} : vector<8x8xf32> to vector<1x8xf32>
    %251 = vector.broadcast %249 : vector<8x1xf32> to vector<8x8xf32>
    %252 = vector.broadcast %250 : vector<1x8xf32> to vector<8x8xf32>
    %253 = arith.mulf %251, %252 : vector<8x8xf32>
    %254 = arith.addf %248, %253 : vector<8x8xf32>
    %255 = vector.extract_strided_slice %169 {offsets = [0, 6], sizes = [8, 1], strides = [1, 1]} : vector<8x8xf32> to vector<8x1xf32>
    %256 = vector.extract_strided_slice %4 {offsets = [6, 0], sizes = [1, 8], strides = [1, 1]} : vector<8x8xf32> to vector<1x8xf32>
    %257 = vector.broadcast %255 : vector<8x1xf32> to vector<8x8xf32>
    %258 = vector.broadcast %256 : vector<1x8xf32> to vector<8x8xf32>
    %259 = arith.mulf %257, %258 : vector<8x8xf32>
    %260 = arith.addf %254, %259 : vector<8x8xf32>
    %261 = vector.extract_strided_slice %169 {offsets = [0, 7], sizes = [8, 1], strides = [1, 1]} : vector<8x8xf32> to vector<8x1xf32>
    %262 = vector.extract_strided_slice %4 {offsets = [7, 0], sizes = [1, 8], strides = [1, 1]} : vector<8x8xf32> to vector<1x8xf32>
    %263 = vector.broadcast %261 : vector<8x1xf32> to vector<8x8xf32>
    %264 = vector.broadcast %262 : vector<1x8xf32> to vector<8x8xf32>
    %265 = arith.mulf %263, %264 : vector<8x8xf32>
    %266 = arith.addf %260, %265 : vector<8x8xf32>
    %cst_31 = arith.constant dense<0.000000e+00> : vector<8x8xf32>
    %267 = tpu.matmul %170, %6, %cst_31 {dimension_numbers = #tpu.dot_dimension_numbers<[1], [0], [0], [1], [0, 0, 1, 1], [], []>} : vector<8x128xf32>, vector<128x8xf32>, vector<8x8xf32> -> vector<8x8xf32>
    %268 = arith.addf %266, %267 : vector<8x8xf32>
    %c0_32 = arith.constant 0 : index
    %c128_33 = arith.constant 128 : index
    %269 = vector.load %arg9[%c0_32, %c128_33] : memref<8x256xf32, #tpu.memory_space<vmem>>, vector<8x128xf32>
    tpu.vector_store %arg9[%c0_32, %c128_33], %219 {strides = array<i32>} : memref<8x256xf32, #tpu.memory_space<vmem>>, vector<8x128xf32>,
    %c0_34 = arith.constant 0 : index
    %c0_35 = arith.constant 0 : index
    %270 = vector.load %arg9[%c0_34, %c0_35] : memref<8x256xf32, #tpu.memory_space<vmem>>, vector<8x128xf32>
    %cst_36 = arith.constant dense<0.000000e+00> : vector<8x128xf32>
    %271 = tpu.matmul %270, %1, %cst_36 {dimension_numbers = #tpu.dot_dimension_numbers<[1], [0], [0], [1], [0, 0, 1, 1], [], []>} : vector<8x128xf32>, vector<128x128xf32>, vector<8x128xf32> -> vector<8x128xf32>
    %272 = vector.extract_strided_slice %268 {offsets = [0, 0], sizes = [8, 1], strides = [1, 1]} : vector<8x8xf32> to vector<8x1xf32>
    %273 = vector.extract_strided_slice %3 {offsets = [0, 0], sizes = [1, 128], strides = [1, 1]} : vector<8x128xf32> to vector<1x128xf32>
    %274 = vector.broadcast %272 : vector<8x1xf32> to vector<8x128xf32>
    %275 = vector.broadcast %273 : vector<1x128xf32> to vector<8x128xf32>
    %276 = arith.mulf %274, %275 : vector<8x128xf32>
    %277 = vector.extract_strided_slice %268 {offsets = [0, 1], sizes = [8, 1], strides = [1, 1]} : vector<8x8xf32> to vector<8x1xf32>
    %278 = vector.extract_strided_slice %3 {offsets = [1, 0], sizes = [1, 128], strides = [1, 1]} : vector<8x128xf32> to vector<1x128xf32>
    %279 = vector.broadcast %277 : vector<8x1xf32> to vector<8x128xf32>
    %280 = vector.broadcast %278 : vector<1x128xf32> to vector<8x128xf32>
    %281 = arith.mulf %279, %280 : vector<8x128xf32>
    %282 = arith.addf %276, %281 : vector<8x128xf32>
    %283 = vector.extract_strided_slice %268 {offsets = [0, 2], sizes = [8, 1], strides = [1, 1]} : vector<8x8xf32> to vector<8x1xf32>
    %284 = vector.extract_strided_slice %3 {offsets = [2, 0], sizes = [1, 128], strides = [1, 1]} : vector<8x128xf32> to vector<1x128xf32>
    %285 = vector.broadcast %283 : vector<8x1xf32> to vector<8x128xf32>
    %286 = vector.broadcast %284 : vector<1x128xf32> to vector<8x128xf32>
    %287 = arith.mulf %285, %286 : vector<8x128xf32>
    %288 = arith.addf %282, %287 : vector<8x128xf32>
    %289 = vector.extract_strided_slice %268 {offsets = [0, 3], sizes = [8, 1], strides = [1, 1]} : vector<8x8xf32> to vector<8x1xf32>
    %290 = vector.extract_strided_slice %3 {offsets = [3, 0], sizes = [1, 128], strides = [1, 1]} : vector<8x128xf32> to vector<1x128xf32>
    %291 = vector.broadcast %289 : vector<8x1xf32> to vector<8x128xf32>
    %292 = vector.broadcast %290 : vector<1x128xf32> to vector<8x128xf32>
    %293 = arith.mulf %291, %292 : vector<8x128xf32>
    %294 = arith.addf %288, %293 : vector<8x128xf32>
    %295 = vector.extract_strided_slice %268 {offsets = [0, 4], sizes = [8, 1], strides = [1, 1]} : vector<8x8xf32> to vector<8x1xf32>
    %296 = vector.extract_strided_slice %3 {offsets = [4, 0], sizes = [1, 128], strides = [1, 1]} : vector<8x128xf32> to vector<1x128xf32>
    %297 = vector.broadcast %295 : vector<8x1xf32> to vector<8x128xf32>
    %298 = vector.broadcast %296 : vector<1x128xf32> to vector<8x128xf32>
    %299 = arith.mulf %297, %298 : vector<8x128xf32>
    %300 = arith.addf %294, %299 : vector<8x128xf32>
    %301 = vector.extract_strided_slice %268 {offsets = [0, 5], sizes = [8, 1], strides = [1, 1]} : vector<8x8xf32> to vector<8x1xf32>
    %302 = vector.extract_strided_slice %3 {offsets = [5, 0], sizes = [1, 128], strides = [1, 1]} : vector<8x128xf32> to vector<1x128xf32>
    %303 = vector.broadcast %301 : vector<8x1xf32> to vector<8x128xf32>
    %304 = vector.broadcast %302 : vector<1x128xf32> to vector<8x128xf32>
    %305 = arith.mulf %303, %304 : vector<8x128xf32>
    %306 = arith.addf %300, %305 : vector<8x128xf32>
    %307 = vector.extract_strided_slice %268 {offsets = [0, 6], sizes = [8, 1], strides = [1, 1]} : vector<8x8xf32> to vector<8x1xf32>
    %308 = vector.extract_strided_slice %3 {offsets = [6, 0], sizes = [1, 128], strides = [1, 1]} : vector<8x128xf32> to vector<1x128xf32>
    %309 = vector.broadcast %307 : vector<8x1xf32> to vector<8x128xf32>
    %310 = vector.broadcast %308 : vector<1x128xf32> to vector<8x128xf32>
    %311 = arith.mulf %309, %310 : vector<8x128xf32>
    %312 = arith.addf %306, %311 : vector<8x128xf32>
    %313 = vector.extract_strided_slice %268 {offsets = [0, 7], sizes = [8, 1], strides = [1, 1]} : vector<8x8xf32> to vector<8x1xf32>
    %314 = vector.extract_strided_slice %3 {offsets = [7, 0], sizes = [1, 128], strides = [1, 1]} : vector<8x128xf32> to vector<1x128xf32>
    %315 = vector.broadcast %313 : vector<8x1xf32> to vector<8x128xf32>
    %316 = vector.broadcast %314 : vector<1x128xf32> to vector<8x128xf32>
    %317 = arith.mulf %315, %316 : vector<8x128xf32>
    %318 = arith.addf %312, %317 : vector<8x128xf32>
    %319 = arith.addf %271, %318 : vector<8x128xf32>
    %c0_37 = arith.constant 0 : index
    %c0_38 = arith.constant 0 : index
    %320 = vector.load %arg9[%c0_37, %c0_38] : memref<8x256xf32, #tpu.memory_space<vmem>>, vector<8x128xf32>
    tpu.vector_store %arg9[%c0_37, %c0_38], %319 {strides = array<i32>} : memref<8x256xf32, #tpu.memory_space<vmem>>, vector<8x128xf32>,
    %c0_39 = arith.constant 0 : index
    %c27 = arith.constant 27 : index
    %321 = vector.load %arg9[%c0_39, %c27] : memref<8x256xf32, #tpu.memory_space<vmem>>, vector<8x128xf32>
    %cst_40 = arith.constant dense<0.000000e+00> : vector<8xf32>
    %322 = vector.multi_reduction <add>, %321, %cst_40 [1] : vector<8x128xf32> to vector<8xf32>
    %323 = vector.shape_cast %322 : vector<8xf32> to vector<8x1xf32>
    %cst_41 = arith.constant 7.812500e-03 : f32
    %324 = vector.broadcast %cst_41 : f32 to vector<8x1xf32>
    %325 = arith.mulf %323, %324 : vector<8x1xf32>
    %326 = vector.broadcast %325 : vector<8x1xf32> to vector<8x128xf32>
    %327 = arith.subf %321, %326 : vector<8x128xf32>
    %328 = arith.mulf %327, %327 : vector<8x128xf32>
    %cst_42 = arith.constant dense<0.000000e+00> : vector<8xf32>
    %329 = vector.multi_reduction <add>, %328, %cst_42 [1] : vector<8x128xf32> to vector<8xf32>
    %330 = vector.shape_cast %329 : vector<8xf32> to vector<8x1xf32>
    %cst_43 = arith.constant 0.00787401571 : f32
    %331 = vector.broadcast %cst_43 : f32 to vector<8x1xf32>
    %332 = arith.mulf %330, %331 : vector<8x1xf32>
    %cst_44 = arith.constant 0.000000e+00 : f32
    %333 = vector.broadcast %cst_44 : f32 to vector<8x1xf32>
    %334 = arith.cmpf ogt, %332, %333 : vector<8x1xf32>
    %cst_45 = arith.constant 1.000000e+00 : f32
    %335 = vector.broadcast %cst_45 : f32 to vector<8x1xf32>
    %336 = arith.select %334, %332, %335 : vector<8x1xi1>, vector<8x1xf32>
    %337 = math.rsqrt %336 : vector<8x1xf32>
    %338 = vector.broadcast %337 : vector<8x1xf32> to vector<8x128xf32>
    %339 = arith.mulf %327, %338 : vector<8x128xf32>
    %340 = vector.shape_cast %334 : vector<8x1xi1> to vector<8x1xi1>
    %341 = vector.broadcast %340 : vector<8x1xi1> to vector<8x128xi1>
    %342 = arith.select %341, %339, %321 : vector<8x128xi1>, vector<8x128xf32>
    %c0_46 = arith.constant 0 : index
    %c0_47 = arith.constant 0 : index
    %343 = vector.load %arg10[%c0_46, %c0_47] : memref<8x128xf32, #tpu.memory_space<vmem>>, vector<8x128xf32>
    tpu.vector_store %arg10[%c0_46, %c0_47], %342 {strides = array<i32>} : memref<8x128xf32, #tpu.memory_space<vmem>>, vector<8x128xf32>,
    return
  }
  func.func @transform_0(%arg0: i32) -> (i32, i32) {
    %c0_i32 = arith.constant 0 : i32
    %c0_i32_0 = arith.constant 0 : i32
    %c0_i32_1 = arith.constant 0 : i32
    return %c0_i32, %c0_i32_0 : i32, i32
  }
  func.func @transform_1(%arg0: i32) -> (i32, i32) {
    %c0_i32 = arith.constant 0 : i32
    %c0_i32_0 = arith.constant 0 : i32
    %c0_i32_1 = arith.constant 0 : i32
    return %c0_i32, %c0_i32_0 : i32, i32
  }
  func.func @transform_2(%arg0: i32) -> (i32, i32) {
    %c0_i32 = arith.constant 0 : i32
    %c0_i32_0 = arith.constant 0 : i32
    %c0_i32_1 = arith.constant 0 : i32
    return %c0_i32, %c0_i32_0 : i32, i32
  }
  func.func @transform_3(%arg0: i32) -> (i32, i32) {
    %c0_i32 = arith.constant 0 : i32
    %c0_i32_0 = arith.constant 0 : i32
    %c0_i32_1 = arith.constant 0 : i32
    return %c0_i32, %c0_i32_0 : i32, i32
  }
  func.func @transform_4(%arg0: i32) -> (i32, i32) {
    %c0_i32 = arith.constant 0 : i32
    %c0_i32_0 = arith.constant 0 : i32
    %c0_i32_1 = arith.constant 0 : i32
    return %c0_i32, %c0_i32_0 : i32, i32
  }
  func.func @transform_5(%arg0: i32) -> (i32, i32) {
    %c0_i32 = arith.constant 0 : i32
    %c0_i32_0 = arith.constant 0 : i32
    %c0_i32_1 = arith.constant 0 : i32
    return %c0_i32, %c0_i32_0 : i32, i32
  }
  func.func @transform_6(%arg0: i32) -> (i32, i32) {
    %c0_i32 = arith.constant 0 : i32
    %c0_i32_0 = arith.constant 0 : i32
    %c0_i32_1 = arith.constant 0 : i32
    return %c0_i32, %c0_i32_0 : i32, i32
  }
  func.func @transform_7(%arg0: i32) -> (i32, i32) {
    %c0_i32 = arith.constant 0 : i32
    %c0_i32_0 = arith.constant 0 : i32
    %c0_i32_1 = arith.constant 0 : i32
    return %c0_i32, %c0_i32_0 : i32, i32
  }
  func.func @transform_8(%arg0: i32) -> (i32, i32) {
    %c0_i32 = arith.constant 0 : i32
    %c0_i32_0 = arith.constant 0 : i32
    return %arg0, %c0_i32 : i32, i32
  }
  func.func @transform_9(%arg0: i32) -> (i32, i32) {
    %c0_i32 = arith.constant 0 : i32
    %c0_i32_0 = arith.constant 0 : i32
    return %arg0, %c0_i32 : i32, i32
  }
}

</mosaic_0001>

<llo_original>
// kernel: tpu_custom_call.1
$region0: #{tpu_custom_call.1}
  #allocation0 [shape = 'u32[]', space=smem, size = 0x4, offset = 0x4, fixed_abs, tag = 'smem constant byte address 0x4 - core index']
  #allocation1 [shape = 'u32[72,128]{1,0:T(1,128)}', space=vmem, size = 0x9000, scoped, tag = 'internal scratch']
  %s0 = inlined_call_operand.vmem [shape: f32[128,128], index: 0, kind: input, shape index: {}]
  %s1 = inlined_call_operand.vmem [shape: f32[128,128], index: 1, kind: input, shape index: {}]
  %s2 = inlined_call_operand.hbm [shape: f32[8,128], index: 2, kind: input, shape index: {}]
  %s3 = inlined_call_operand.hbm [shape: f32[8,128], index: 3, kind: input, shape index: {}]
  %s4 = inlined_call_operand.hbm [shape: f32[8,8], index: 4, kind: input, shape index: {}]
  %s5 = inlined_call_operand.vmem [shape: f32[128,8], index: 5, kind: input, shape index: {}]
  %s6 = inlined_call_operand.vmem [shape: f32[128,8], index: 6, kind: input, shape index: {}]
  %s7 = inlined_call_operand.vmem [shape: f32[1,8], index: 7, kind: input, shape index: {}]
  %s8 = inlined_call_operand.vmem [shape: f32[8,256], index: 8, kind: input, shape index: {}]
  %s9 = inlined_call_operand.hbm [shape: f32[8,128], index: 9, kind: output, shape index: {}]
  %s10 = sld [smem:[#allocation0]]
  $region58: #{tpu_custom_call.1} parent=0
    _
  %s12 = ssub.s32 1, %s10
  %s13 = scalar_select 0, %s12, %s10
  $region1: #{tpu_custom_call.1} parent=0
    #allocation2 [shape = 'u8[4096]{0}', space=vmem, size = 0x1000, scoped, tag = 'input window, operand 2, single buffered']
    #allocation3 [shape = 's32[1]{0}', space=sflag, size = 0x4, scoped, tag = 'scoped memory for tpu_custom_call.1']
    #allocation4 [shape = 's32[1]{0}', space=sflag, size = 0x4, scoped, tag = 'scoped memory for tpu_custom_call.1']
    #allocation5 [shape = 'u8[4096]{0}', space=vmem, size = 0x1000, scoped, tag = 'input window, operand 3, single buffered']
    #allocation6 [shape = 's32[1]{0}', space=sflag, size = 0x4, scoped, tag = 'scoped memory for tpu_custom_call.1']
    #allocation7 [shape = 'u8[4096]{0}', space=vmem, size = 0x1000, scoped, tag = 'input window, operand 4, single buffered']
    #allocation8 [shape = 'u8[4096]{0}', space=vmem, size = 0x1000, scoped, tag = 'output window, operand 0, single buffered']
    %14 = vsyncpa [#allocation3], 0
    %15 = vsyncpa [#allocation6], 0
    %16 = vsyncpa [#allocation4], 0
    // Predicated region
    $region2: #{tpu_custom_call.1} parent=1 // pred_check
      _
    $region3: #{tpu_custom_call.1} parent=1 // pred_check_branch
      %18 = sbr.rel (0) target = $region5
    $region4: #{tpu_custom_call.1} parent=1 // pred_region
      _
    $region5: #{tpu_custom_call.1} parent=1 // pred_fallthru
      _
    // Predicated region
    $region6: #{tpu_custom_call.1} parent=1 // pred_check
      _
    $region7: #{tpu_custom_call.1} parent=1 // pred_check_branch
      %20 = sbr.rel (0) target = $region9
    $region8: #{tpu_custom_call.1} parent=1 // pred_region
      _
    $region9: #{tpu_custom_call.1} parent=1 // pred_fallthru
      _
    // Predicated region
    $region10: #{tpu_custom_call.1} parent=1 // pred_check
      _
    $region11: #{tpu_custom_call.1} parent=1 // pred_check_branch
      %22 = sbr.rel (0) target = $region13
    $region12: #{tpu_custom_call.1} parent=1 // pred_region
      %24 = vsyncadd [#allocation3], 0
      %s26 = sshll.u32 %s2, 4
      %s27 = int_to_ptr.hbm [resolvable:$true] %s26
      %s28 = sshll.u32 [#allocation2], 4
      %s29 = int_to_ptr.vmem [resolvable:$true] %s28
      %31 = dma.hbm_to_vmem [thread:$0]  %s27, 128, %s29, [#allocation3]
    $region13: #{tpu_custom_call.1} parent=1 // pred_fallthru
      _
    // Predicated region
    $region14: #{tpu_custom_call.1} parent=1 // pred_check
      _
    $region15: #{tpu_custom_call.1} parent=1 // pred_check_branch
      %33 = sbr.rel (0) target = $region17
    $region16: #{tpu_custom_call.1} parent=1 // pred_region
      %35 = vsyncadd [#allocation6], 0
      %s37 = sshll.u32 %s3, 4
      %s38 = int_to_ptr.hbm [resolvable:$true] %s37
      %s39 = sshll.u32 [#allocation5], 4
      %s40 = int_to_ptr.vmem [resolvable:$true] %s39
      %42 = dma.hbm_to_vmem [thread:$0]  %s38, 128, %s40, [#allocation6]
    $region17: #{tpu_custom_call.1} parent=1 // pred_fallthru
      _
    // Predicated region
    $region18: #{tpu_custom_call.1} parent=1 // pred_check
      _
    $region19: #{tpu_custom_call.1} parent=1 // pred_check_branch
      %44 = sbr.rel (0) target = $region21
    $region20: #{tpu_custom_call.1} parent=1 // pred_region
      %46 = vsyncadd [#allocation6], 0
      %s48 = sshll.u32 %s4, 4
      %s49 = int_to_ptr.hbm [resolvable:$true] %s48
      %s50 = sshll.u32 [#allocation7], 4
      %s51 = int_to_ptr.vmem [resolvable:$true] %s50
      %53 = dma.hbm_to_vmem [thread:$0]  %s49, 128, %s51, [#allocation6]
    $region21: #{tpu_custom_call.1} parent=1 // pred_fallthru
      _
    // Predicated region
    $region22: #{tpu_custom_call.1} parent=1 // pred_check
      _
    $region23: #{tpu_custom_call.1} parent=1 // pred_check_branch
      %55 = sbr.rel (0) target = $region25
    $region24: #{tpu_custom_call.1} parent=1 // pred_region
      _
    $region25: #{tpu_custom_call.1} parent=1 // pred_fallthru
      _
    // Predicated region
    $region26: #{tpu_custom_call.1} parent=1 // pred_check
      _
    $region27: #{tpu_custom_call.1} parent=1 // pred_check_branch
      %57 = sbr.rel (0) target = $region29
    $region28: #{tpu_custom_call.1} parent=1 // pred_region
      _
    $region29: #{tpu_custom_call.1} parent=1 // pred_fallthru
      _
    // Predicated region
    $region30: #{tpu_custom_call.1} parent=1 // pred_check
      _
    $region31: #{tpu_custom_call.1} parent=1 // pred_check_branch
      %59 = sbr.rel (0) target = $region33
    $region32: #{tpu_custom_call.1} parent=1 // pred_region
      _
    $region33: #{tpu_custom_call.1} parent=1 // pred_fallthru
      _
    // Predicated region
    $region34: #{tpu_custom_call.1} parent=1 // pred_check
      _
    $region35: #{tpu_custom_call.1} parent=1 // pred_check_branch
      %61 = sbr.rel (0) target = $region37
    $region36: #{tpu_custom_call.1} parent=1 // pred_region
      _
    $region37: #{tpu_custom_call.1} parent=1 // pred_fallthru
      _
    // Predicated region
    $region38: #{tpu_custom_call.1} parent=1 // pred_check
      _
    $region39: #{tpu_custom_call.1} parent=1 // pred_check_branch
      %63 = sbr.rel (0) target = $region41
    $region40: #{tpu_custom_call.1} parent=1 // pred_region
      %65 = dma.done [#allocation3], 128
    $region41: #{tpu_custom_call.1} parent=1 // pred_fallthru
      _
    // Predicated region
    $region42: #{tpu_custom_call.1} parent=1 // pred_check
      _
    $region43: #{tpu_custom_call.1} parent=1 // pred_check_branch
      %67 = sbr.rel (0) target = $region45
    $region44: #{tpu_custom_call.1} parent=1 // pred_region
      %69 = dma.done [#allocation6], 128
    $region45: #{tpu_custom_call.1} parent=1 // pred_fallthru
      _
    // Predicated region
    $region46: #{tpu_custom_call.1} parent=1 // pred_check
      _
    $region47: #{tpu_custom_call.1} parent=1 // pred_check_branch
      %71 = sbr.rel (0) target = $region49
    $region48: #{tpu_custom_call.1} parent=1 // pred_region
      %73 = dma.done [#allocation6], 128
    $region49: #{tpu_custom_call.1} parent=1 // pred_fallthru
      _
    %v74 = vld [vmem:[%s0] sm:$0xff]
    %v75 = vld [vmem:[%s0 + $0x8] sm:$0xff]
    %v76 = vld [vmem:[%s0 + $0x10] sm:$0xff]
    %v77 = vld [vmem:[%s0 + $0x18] sm:$0xff]
    %v78 = vld [vmem:[%s0 + $0x20] sm:$0xff]
    %v79 = vld [vmem:[%s0 + $0x28] sm:$0xff]
    %v80 = vld [vmem:[%s0 + $0x30] sm:$0xff]
    %v81 = vld [vmem:[%s0 + $0x38] sm:$0xff]
    %v82 = vld [vmem:[%s0 + $0x40] sm:$0xff]
    %v83 = vld [vmem:[%s0 + $0x48] sm:$0xff]
    %v84 = vld [vmem:[%s0 + $0x50] sm:$0xff]
    %v85 = vld [vmem:[%s0 + $0x58] sm:$0xff]
    %v86 = vld [vmem:[%s0 + $0x60] sm:$0xff]
    %v87 = vld [vmem:[%s0 + $0x68] sm:$0xff]
    %v88 = vld [vmem:[%s0 + $0x70] sm:$0xff]
    %v89 = vld [vmem:[%s0 + $0x78] sm:$0xff]
    %v90 = vld [vmem:[%s1] sm:$0xff]
    %v91 = vld [vmem:[%s1 + $0x8] sm:$0xff]
    %v92 = vld [vmem:[%s1 + $0x10] sm:$0xff]
    %v93 = vld [vmem:[%s1 + $0x18] sm:$0xff]
    %v94 = vld [vmem:[%s1 + $0x20] sm:$0xff]
    %v95 = vld [vmem:[%s1 + $0x28] sm:$0xff]
    %v96 = vld [vmem:[%s1 + $0x30] sm:$0xff]
    %v97 = vld [vmem:[%s1 + $0x38] sm:$0xff]
    %v98 = vld [vmem:[%s1 + $0x40] sm:$0xff]
    %v99 = vld [vmem:[%s1 + $0x48] sm:$0xff]
    %v100 = vld [vmem:[%s1 + $0x50] sm:$0xff]
    %v101 = vld [vmem:[%s1 + $0x58] sm:$0xff]
    %v102 = vld [vmem:[%s1 + $0x60] sm:$0xff]
    %v103 = vld [vmem:[%s1 + $0x68] sm:$0xff]
    %v104 = vld [vmem:[%s1 + $0x70] sm:$0xff]
    %v105 = vld [vmem:[%s1 + $0x78] sm:$0xff]
    %v106 = vld [vmem:[#allocation2] sm:$0xff]
    %v107 = vld [vmem:[#allocation5] sm:$0xff]
    %v108 = vld [vmem:[#allocation7] sm:$0xff]
    %v109 = vld [vmem:[%s5] sm:$0xff]
    %v110 = vld [vmem:[%s5 + $0x8] sm:$0xff]
    %v111 = vld [vmem:[%s5 + $0x10] sm:$0xff]
    %v112 = vld [vmem:[%s5 + $0x18] sm:$0xff]
    %v113 = vld [vmem:[%s5 + $0x20] sm:$0xff]
    %v114 = vld [vmem:[%s5 + $0x28] sm:$0xff]
    %v115 = vld [vmem:[%s5 + $0x30] sm:$0xff]
    %v116 = vld [vmem:[%s5 + $0x38] sm:$0xff]
    %v117 = vld [vmem:[%s5 + $0x40] sm:$0xff]
    %v118 = vld [vmem:[%s5 + $0x48] sm:$0xff]
    %v119 = vld [vmem:[%s5 + $0x50] sm:$0xff]
    %v120 = vld [vmem:[%s5 + $0x58] sm:$0xff]
    %v121 = vld [vmem:[%s5 + $0x60] sm:$0xff]
    %v122 = vld [vmem:[%s5 + $0x68] sm:$0xff]
    %v123 = vld [vmem:[%s5 + $0x70] sm:$0xff]
    %v124 = vld [vmem:[%s5 + $0x78] sm:$0xff]
    %v125 = vld [vmem:[%s6] sm:$0xff]
    %v126 = vld [vmem:[%s6 + $0x8] sm:$0xff]
    %v127 = vld [vmem:[%s6 + $0x10] sm:$0xff]
    %v128 = vld [vmem:[%s6 + $0x18] sm:$0xff]
    %v129 = vld [vmem:[%s6 + $0x20] sm:$0xff]
    %v130 = vld [vmem:[%s6 + $0x28] sm:$0xff]
    %v131 = vld [vmem:[%s6 + $0x30] sm:$0xff]
    %v132 = vld [vmem:[%s6 + $0x38] sm:$0xff]
    %v133 = vld [vmem:[%s6 + $0x40] sm:$0xff]
    %v134 = vld [vmem:[%s6 + $0x48] sm:$0xff]
    %v135 = vld [vmem:[%s6 + $0x50] sm:$0xff]
    %v136 = vld [vmem:[%s6 + $0x58] sm:$0xff]
    %v137 = vld [vmem:[%s6 + $0x60] sm:$0xff]
    %v138 = vld [vmem:[%s6 + $0x68] sm:$0xff]
    %v139 = vld [vmem:[%s6 + $0x70] sm:$0xff]
    %v140 = vld [vmem:[%s6 + $0x78] sm:$0xff]
    %v141 = vld [vmem:[%s7] sm:$0x1]
    %v142 = vld [vmem:[%s8] sm:$0xff]
    %v144 = vperm.slane %v141, 0
    %147 = vset.pattern.permute.xlu0 0
    %148 = vperm.xlu0 %147, %v142
    %v149 = vpop.permute.xlu0 %148
    %v151 = vmul.f32 %v144, %v149
    %153 = vset.pattern.permute.xlu0 0
    %154 = vperm.xlu0 %153, %v151
    %v155 = vpop.permute.xlu0 %154
    %v157 = vperm.slane %v106, 0
    %v158 = vmul.f32 %v155, %v157
    %159 = vset.pattern.permute.xlu0 1
    %160 = vperm.xlu0 %159, %v151
    %v161 = vpop.permute.xlu0 %160
    %v163 = vperm.slane %v106, 1
    %v164 = vmul.f32 %v161, %v163
    %v165 = vadd.f32 %v158, %v164
    %166 = vset.pattern.permute.xlu0 2
    %167 = vperm.xlu0 %166, %v151
    %v168 = vpop.permute.xlu0 %167
    %v170 = vperm.slane %v106, 2
    %v171 = vmul.f32 %v168, %v170
    %v172 = vadd.f32 %v165, %v171
    %173 = vset.pattern.permute.xlu0 3
    %174 = vperm.xlu0 %173, %v151
    %v175 = vpop.permute.xlu0 %174
    %v177 = vperm.slane %v106, 3
    %v178 = vmul.f32 %v175, %v177
    %v179 = vadd.f32 %v172, %v178
    %180 = vset.pattern.permute.xlu0 4
    %181 = vperm.xlu0 %180, %v151
    %v182 = vpop.permute.xlu0 %181
    %v184 = vperm.slane %v106, 4
    %v185 = vmul.f32 %v182, %v184
    %v186 = vadd.f32 %v179, %v185
    %187 = vset.pattern.permute.xlu0 5
    %188 = vperm.xlu0 %187, %v151
    %v189 = vpop.permute.xlu0 %188
    %v191 = vperm.slane %v106, 5
    %v192 = vmul.f32 %v189, %v191
    %v193 = vadd.f32 %v186, %v192
    %194 = vset.pattern.permute.xlu0 6
    %195 = vperm.xlu0 %194, %v151
    %v196 = vpop.permute.xlu0 %195
    %v198 = vperm.slane %v106, 6
    %v199 = vmul.f32 %v196, %v198
    %v200 = vadd.f32 %v193, %v199
    %201 = vset.pattern.permute.xlu0 7
    %202 = vperm.xlu0 %201, %v151
    %v203 = vpop.permute.xlu0 %202
    %v205 = vperm.slane %v106, 7
    %v206 = vmul.f32 %v203, %v205
    %v207 = vadd.f32 %v200, %v206
    %208 = vmatpush.msra.mxu0 %v89
    %209 = vmatpush.msra.mxu0 %v88
    %210 = vmatpush.msra.mxu0 %v87
    %211 = vmatpush.msra.mxu0 %v86
    %212 = vmatpush.msra.mxu0 %v85
    %213 = vmatpush.msra.mxu0 %v84
    %214 = vmatpush.msra.mxu0 %v83
    %215 = vmatpush.msra.mxu0 %v82
    %216 = vmatpush.msra.mxu0 %v81
    %217 = vmatpush.msra.mxu0 %v80
    %218 = vmatpush.msra.mxu0 %v79
    %219 = vmatpush.msra.mxu0 %v78
    %220 = vmatpush.msra.mxu0 %v77
    %221 = vmatpush.msra.mxu0 %v76
    %222 = vmatpush.msra.mxu0 %v75
    %223 = vmatpush.msra.mxu0 %v74
    %224 = vmatmul.f32.gmra.mxu0 %v142
    %v225 = vpop.f32.mrf.mxu0
    %v226 = vadd.f32 %v207, %v225
    %227 = vdwg.mxu0
    %v228 = vperm.slane %v108, 0
    %v229 = vmul.f32 %v155, %v228
    %v230 = vperm.slane %v108, 1
    %v231 = vmul.f32 %v161, %v230
    %v232 = vadd.f32 %v229, %v231
    %v233 = vperm.slane %v108, 2
    %v234 = vmul.f32 %v168, %v233
    %v235 = vadd.f32 %v232, %v234
    %v236 = vperm.slane %v108, 3
    %v237 = vmul.f32 %v175, %v236
    %v238 = vadd.f32 %v235, %v237
    %v239 = vperm.slane %v108, 4
    %v240 = vmul.f32 %v182, %v239
    %v241 = vadd.f32 %v238, %v240
    %v242 = vperm.slane %v108, 5
    %v243 = vmul.f32 %v189, %v242
    %v244 = vadd.f32 %v241, %v243
    %v245 = vperm.slane %v108, 6
    %v246 = vmul.f32 %v196, %v245
    %v247 = vadd.f32 %v244, %v246
    %v248 = vperm.slane %v108, 7
    %v249 = vmul.f32 %v203, %v248
    %v250 = vadd.f32 %v247, %v249
    %251 = vmatpush.msra.mxu0 %v124
    %252 = vmatpush.msra.mxu0 %v123
    %253 = vmatpush.msra.mxu0 %v122
    %254 = vmatpush.msra.mxu0 %v121
    %255 = vmatpush.msra.mxu0 %v120
    %256 = vmatpush.msra.mxu0 %v119
    %257 = vmatpush.msra.mxu0 %v118
    %258 = vmatpush.msra.mxu0 %v117
    %259 = vmatpush.msra.mxu0 %v116
    %260 = vmatpush.msra.mxu0 %v115
    %261 = vmatpush.msra.mxu0 %v114
    %262 = vmatpush.msra.mxu0 %v113
    %263 = vmatpush.msra.mxu0 %v112
    %264 = vmatpush.msra.mxu0 %v111
    %265 = vmatpush.msra.mxu0 %v110
    %266 = vmatpush.msra.mxu0 %v109
    %267 = vmatmul.f32.gmra.mxu0 %v142
    %v268 = vpop.f32.mrf.mxu0
    %v269 = vadd.f32 0.0, %v268
    %270 = vdwg.mxu0
    %v271 = vadd.f32 %v250, %v269
    %272 = vst [vmem:[%s8] sm:$0xff] %v226
    %v273 = vld [vmem:[%s8 + $0x8] sm:$0xff]
    %275 = vset.pattern.permute.xlu0 0
    %276 = vperm.xlu0 %275, %v271
    %v277 = vpop.permute.xlu0 %276
    %v279 = vmul.f32 %v277, %v157
    %280 = vset.pattern.permute.xlu0 1
    %281 = vperm.xlu0 %280, %v271
    %v282 = vpop.permute.xlu0 %281
    %v284 = vmul.f32 %v282, %v163
    %v285 = vadd.f32 %v279, %v284
    %286 = vset.pattern.permute.xlu0 2
    %287 = vperm.xlu0 %286, %v271
    %v288 = vpop.permute.xlu0 %287
    %v290 = vmul.f32 %v288, %v170
    %v291 = vadd.f32 %v285, %v290
    %292 = vset.pattern.permute.xlu0 3
    %293 = vperm.xlu0 %292, %v271
    %v294 = vpop.permute.xlu0 %293
    %v296 = vmul.f32 %v294, %v177
    %v297 = vadd.f32 %v291, %v296
    %298 = vset.pattern.permute.xlu0 4
    %299 = vperm.xlu0 %298, %v271
    %v300 = vpop.permute.xlu0 %299
    %v302 = vmul.f32 %v300, %v184
    %v303 = vadd.f32 %v297, %v302
    %304 = vset.pattern.permute.xlu0 5
    %305 = vperm.xlu0 %304, %v271
    %v306 = vpop.permute.xlu0 %305
    %v308 = vmul.f32 %v306, %v191
    %v309 = vadd.f32 %v303, %v308
    %310 = vset.pattern.permute.xlu0 6
    %311 = vperm.xlu0 %310, %v271
    %v312 = vpop.permute.xlu0 %311
    %v314 = vmul.f32 %v312, %v198
    %v315 = vadd.f32 %v309, %v314
    %316 = vset.pattern.permute.xlu0 7
    %317 = vperm.xlu0 %316, %v271
    %v318 = vpop.permute.xlu0 %317
    %v320 = vmul.f32 %v318, %v205
    %v321 = vadd.f32 %v315, %v320
    %322 = vmatpush.msra.mxu0 %v89
    %323 = vmatpush.msra.mxu0 %v88
    %324 = vmatpush.msra.mxu0 %v87
    %325 = vmatpush.msra.mxu0 %v86
    %326 = vmatpush.msra.mxu0 %v85
    %327 = vmatpush.msra.mxu0 %v84
    %328 = vmatpush.msra.mxu0 %v83
    %329 = vmatpush.msra.mxu0 %v82
    %330 = vmatpush.msra.mxu0 %v81
    %331 = vmatpush.msra.mxu0 %v80
    %332 = vmatpush.msra.mxu0 %v79
    %333 = vmatpush.msra.mxu0 %v78
    %334 = vmatpush.msra.mxu0 %v77
    %335 = vmatpush.msra.mxu0 %v76
    %336 = vmatpush.msra.mxu0 %v75
    %337 = vmatpush.msra.mxu0 %v74
    %338 = vmatmul.f32.gmra.mxu0 %v273
    %v339 = vpop.f32.mrf.mxu0
    %v340 = vadd.f32 %v321, %v339
    %341 = vdwg.mxu0
    %342 = vst [vmem:[%s8 + $0x8] sm:$0xff] %v340
    %v343 = vld [vmem:[%s8 + $0x8] sm:$0xff]
    %345 = vset.pattern.permute.xlu0 85
    %346 = vperm.xlu0 %345, %v343
    %v347 = vpop.permute.xlu0 %346
    %vm349 = vcmask 1048240
    %350 = vst.msk [vmem:[%s8 + $0x8] sm:$0xff] %vm349, %v347
    %v351 = vmul.f32 %v144, %v347
    %v352 = vld [vmem:[%s8 + $0x8] sm:$0xff]
    %354 = vset.pattern.permute.xlu0 0
    %355 = vperm.xlu0 %354, %v351
    %v356 = vpop.permute.xlu0 %355
    %v358 = vperm.slane %v107, 0
    %v359 = vmul.f32 %v356, %v358
    %360 = vset.pattern.permute.xlu0 1
    %361 = vperm.xlu0 %360, %v351
    %v362 = vpop.permute.xlu0 %361
    %v364 = vperm.slane %v107, 1
    %v365 = vmul.f32 %v362, %v364
    %v366 = vadd.f32 %v359, %v365
    %367 = vset.pattern.permute.xlu0 2
    %368 = vperm.xlu0 %367, %v351
    %v369 = vpop.permute.xlu0 %368
    %v371 = vperm.slane %v107, 2
    %v372 = vmul.f32 %v369, %v371
    %v373 = vadd.f32 %v366, %v372
    %374 = vset.pattern.permute.xlu0 3
    %375 = vperm.xlu0 %374, %v351
    %v376 = vpop.permute.xlu0 %375
    %v378 = vperm.slane %v107, 3
    %v379 = vmul.f32 %v376, %v378
    %v380 = vadd.f32 %v373, %v379
    %381 = vset.pattern.permute.xlu0 4
    %382 = vperm.xlu0 %381, %v351
    %v383 = vpop.permute.xlu0 %382
    %v385 = vperm.slane %v107, 4
    %v386 = vmul.f32 %v383, %v385
    %v387 = vadd.f32 %v380, %v386
    %388 = vset.pattern.permute.xlu0 5
    %389 = vperm.xlu0 %388, %v351
    %v390 = vpop.permute.xlu0 %389
    %v392 = vperm.slane %v107, 5
    %v393 = vmul.f32 %v390, %v392
    %v394 = vadd.f32 %v387, %v393
    %395 = vset.pattern.permute.xlu0 6
    %396 = vperm.xlu0 %395, %v351
    %v397 = vpop.permute.xlu0 %396
    %v399 = vperm.slane %v107, 6
    %v400 = vmul.f32 %v397, %v399
    %v401 = vadd.f32 %v394, %v400
    %402 = vset.pattern.permute.xlu0 7
    %403 = vperm.xlu0 %402, %v351
    %v404 = vpop.permute.xlu0 %403
    %v406 = vperm.slane %v107, 7
    %v407 = vmul.f32 %v404, %v406
    %v408 = vadd.f32 %v401, %v407
    %409 = vmatpush.msra.mxu0 %v105
    %410 = vmatpush.msra.mxu0 %v104
    %411 = vmatpush.msra.mxu0 %v103
    %412 = vmatpush.msra.mxu0 %v102
    %413 = vmatpush.msra.mxu0 %v101
    %414 = vmatpush.msra.mxu0 %v100
    %415 = vmatpush.msra.mxu0 %v99
    %416 = vmatpush.msra.mxu0 %v98
    %417 = vmatpush.msra.mxu0 %v97
    %418 = vmatpush.msra.mxu0 %v96
    %419 = vmatpush.msra.mxu0 %v95
    %420 = vmatpush.msra.mxu0 %v94
    %421 = vmatpush.msra.mxu0 %v93
    %422 = vmatpush.msra.mxu0 %v92
    %423 = vmatpush.msra.mxu0 %v91
    %424 = vmatpush.msra.mxu0 %v90
    %425 = vmatmul.f32.gmra.mxu0 %v352
    %v426 = vpop.f32.mrf.mxu0
    %v427 = vadd.f32 %v408, %v426
    %428 = vdwg.mxu0
    %v429 = vmul.f32 %v356, %v228
    %v430 = vmul.f32 %v362, %v230
    %v431 = vadd.f32 %v429, %v430
    %v432 = vmul.f32 %v369, %v233
    %v433 = vadd.f32 %v431, %v432
    %v434 = vmul.f32 %v376, %v236
    %v435 = vadd.f32 %v433, %v434
    %v436 = vmul.f32 %v383, %v239
    %v437 = vadd.f32 %v435, %v436
    %v438 = vmul.f32 %v390, %v242
    %v439 = vadd.f32 %v437, %v438
    %v440 = vmul.f32 %v397, %v245
    %v441 = vadd.f32 %v439, %v440
    %v442 = vmul.f32 %v404, %v248
    %v443 = vadd.f32 %v441, %v442
    %444 = vmatpush.msra.mxu0 %v140
    %445 = vmatpush.msra.mxu0 %v139
    %446 = vmatpush.msra.mxu0 %v138
    %447 = vmatpush.msra.mxu0 %v137
    %448 = vmatpush.msra.mxu0 %v136
    %449 = vmatpush.msra.mxu0 %v135
    %450 = vmatpush.msra.mxu0 %v134
    %451 = vmatpush.msra.mxu0 %v133
    %452 = vmatpush.msra.mxu0 %v132
    %453 = vmatpush.msra.mxu0 %v131
    %454 = vmatpush.msra.mxu0 %v130
    %455 = vmatpush.msra.mxu0 %v129
    %456 = vmatpush.msra.mxu0 %v128
    %457 = vmatpush.msra.mxu0 %v127
    %458 = vmatpush.msra.mxu0 %v126
    %459 = vmatpush.msra.mxu0 %v125
    %460 = vmatmul.f32.gmra.mxu0 %v352
    %v461 = vpop.f32.mrf.mxu0
    %v462 = vadd.f32 0.0, %v461
    %463 = vdwg.mxu0
    %v464 = vadd.f32 %v443, %v462
    %465 = vst [vmem:[%s8 + $0x8] sm:$0xff] %v427
    %v466 = vld [vmem:[%s8] sm:$0xff]
    %468 = vset.pattern.permute.xlu0 0
    %469 = vperm.xlu0 %468, %v464
    %v470 = vpop.permute.xlu0 %469
    %v472 = vmul.f32 %v470, %v358
    %473 = vset.pattern.permute.xlu0 1
    %474 = vperm.xlu0 %473, %v464
    %v475 = vpop.permute.xlu0 %474
    %v477 = vmul.f32 %v475, %v364
    %v478 = vadd.f32 %v472, %v477
    %479 = vset.pattern.permute.xlu0 2
    %480 = vperm.xlu0 %479, %v464
    %v481 = vpop.permute.xlu0 %480
    %v483 = vmul.f32 %v481, %v371
    %v484 = vadd.f32 %v478, %v483
    %485 = vset.pattern.permute.xlu0 3
    %486 = vperm.xlu0 %485, %v464
    %v487 = vpop.permute.xlu0 %486
    %v489 = vmul.f32 %v487, %v378
    %v490 = vadd.f32 %v484, %v489
    %491 = vset.pattern.permute.xlu0 4
    %492 = vperm.xlu0 %491, %v464
    %v493 = vpop.permute.xlu0 %492
    %v495 = vmul.f32 %v493, %v385
    %v496 = vadd.f32 %v490, %v495
    %497 = vset.pattern.permute.xlu0 5
    %498 = vperm.xlu0 %497, %v464
    %v499 = vpop.permute.xlu0 %498
    %v501 = vmul.f32 %v499, %v392
    %v502 = vadd.f32 %v496, %v501
    %503 = vset.pattern.permute.xlu0 6
    %504 = vperm.xlu0 %503, %v464
    %v505 = vpop.permute.xlu0 %504
    %v507 = vmul.f32 %v505, %v399
    %v508 = vadd.f32 %v502, %v507
    %509 = vset.pattern.permute.xlu0 7
    %510 = vperm.xlu0 %509, %v464
    %v511 = vpop.permute.xlu0 %510
    %v513 = vmul.f32 %v511, %v406
    %v514 = vadd.f32 %v508, %v513
    %515 = vmatpush.msra.mxu0 %v105
    %516 = vmatpush.msra.mxu0 %v104
    %517 = vmatpush.msra.mxu0 %v103
    %518 = vmatpush.msra.mxu0 %v102
    %519 = vmatpush.msra.mxu0 %v101
    %520 = vmatpush.msra.mxu0 %v100
    %521 = vmatpush.msra.mxu0 %v99
    %522 = vmatpush.msra.mxu0 %v98
    %523 = vmatpush.msra.mxu0 %v97
    %524 = vmatpush.msra.mxu0 %v96
    %525 = vmatpush.msra.mxu0 %v95
    %526 = vmatpush.msra.mxu0 %v94
    %527 = vmatpush.msra.mxu0 %v93
    %528 = vmatpush.msra.mxu0 %v92
    %529 = vmatpush.msra.mxu0 %v91
    %530 = vmatpush.msra.mxu0 %v90
    %531 = vmatmul.f32.gmra.mxu0 %v466
    %v532 = vpop.f32.mrf.mxu0
    %v533 = vadd.f32 %v514, %v532
    %534 = vdwg.mxu0
    %535 = vst [vmem:[%s8] sm:$0xff] %v533
    %v536 = vld [vmem:[%s8] sm:$0xff]
    %v537 = vld [vmem:[%s8 + $0x8] sm:$0xff]
    %540 = vrot.lane.b32.xlu0 %v536, 101
    %v541 = vpop.permute.xlu0 %540
    %542 = vrot.lane.b32.xlu0 %v537, 101
    %v543 = vpop.permute.xlu0 %542
    %vm544 = vcmask 826368
    %v545 = vsel %vm544, %v541, %v543
    %547 = vadd.xlane.f32.xlu0 %v545
    %v548 = vpop.xlane.xlu0 %547
    %v549 = vmul.f32 %v548, 0.0078125
    %v550 = vsub.f32 %v536, %v549
    %v551 = vsub.f32 %v537, %v549
    %v552 = vmul.f32 %v550, %v550
    %v553 = vmul.f32 %v551, %v551
    %556 = vrot.lane.b32.xlu0 %v552, 101
    %v557 = vpop.permute.xlu0 %556
    %558 = vrot.lane.b32.xlu0 %v553, 101
    %v559 = vpop.permute.xlu0 %558
    %v560 = vsel %vm544, %v557, %v559
    %562 = vadd.xlane.f32.xlu0 %v560
    %v563 = vpop.xlane.xlu0 %562
    %v564 = vmul.f32 %v563, 0.007874016
    %vm565 = vcmp.gt.f32.partialorder %v564, 0.0
    %v566 = vsel %vm565, %v564, 1.0
    %v567 = vrsqrt.pop %v566
    %v568 = vmul.f32 %v567, %v566
    %v569 = vmul.f32 %v568, %v567
    %v570 = vmul.f32 0.5, %v569
    %v571 = vsub.f32 1.5, %v570
    %v572 = vmul.f32 %v567, %v571
    %vm573 = vweird.f32 %v566
    %vm574 = vweird.f32 %v567
    %vm575 = vmor %vm573, %vm574
    %v576 = vsel %vm575, %v567, %v572
    %v577 = vmul.f32 %v550, %v576
    %v578 = vmul.f32 %v551, %v576
    %v579 = vsel %vm565, 1, 0
    %vm580 = vcmp.eq.s32.totalorder %v579, 1
    %v581 = vsel %vm580, %v577, %v536
    %v582 = vsel %vm580, %v578, %v537
    %585 = vrot.lane.b32.xlu0 %v581, 101
    %v586 = vpop.permute.xlu0 %585
    %587 = vrot.lane.b32.xlu0 %v582, 101
    %v588 = vpop.permute.xlu0 %587
    %v589 = vsel %vm544, %v586, %v588
    %591 = vst [vmem:[#allocation8] sm:$0xff] %v589
    // Predicated region
    $region50: #{tpu_custom_call.1} parent=1 // pred_check
      _
    $region51: #{tpu_custom_call.1} parent=1 // pred_check_branch
      %593 = sbr.rel (0) target = $region53
    $region52: #{tpu_custom_call.1} parent=1 // pred_region
      %595 = vsyncadd [#allocation4], 0
      %s597 = sshll.u32 [#allocation8], 4
      %s598 = int_to_ptr.vmem [resolvable:$true] %s597
      %s599 = sshll.u32 %s9, 4
      %s600 = int_to_ptr.hbm [resolvable:$true] %s599
      %602 = dma.vmem_to_hbm [thread:$0]  %s598, 128, %s600, [#allocation4]
    $region53: #{tpu_custom_call.1} parent=1 // pred_fallthru
      _
    // Predicated region
    $region54: #{tpu_custom_call.1} parent=1 // pred_check
      _
    $region55: #{tpu_custom_call.1} parent=1 // pred_check_branch
      %604 = sbr.rel (0) target = $region57
    $region56: #{tpu_custom_call.1} parent=1 // pred_region
      %606 = dma.done [#allocation4], 128
    $region57: #{tpu_custom_call.1} parent=1 // pred_fallthru
      _
    %607 = vsyncpa [#allocation3], 1
    %608 = vsyncpa [#allocation6], 1
    %609 = vsyncpa [#allocation4], 1

</llo_original>
